<compile_context>
chip_gen: v7x
topology: tpu7x:2x2x1
jax: 0.10.0
libtpu: 0.0.40
codegen_flags: <defaults>
</compile_context>

<pallas_src>
import functools

import jax
import jax.numpy as jnp
from jax.experimental import pallas as pl
from jax.experimental.pallas import tpu as pltpu


# ----------------------------------------------------------------------------
# Small helpers: layout-aware VMEM accounting.
# ----------------------------------------------------------------------------
def _round_up(x, m):
    return (x + m - 1) // m * m


def _vmem_tile_bytes(rows, cols, itemsize):
    """Bytes of a (rows, cols) VMEM tile after (sublane, 128-lane) padding.
    Sub-32-bit dtypes pack along sublanes (bf16 -> 16-row tiles)."""
    sub = 8 * (4 // itemsize)
    return _round_up(max(int(rows), 1), sub) * _round_up(max(int(cols), 1), 128) * itemsize


def _vmem_limit(estimate_bytes):
    """Explicit scoped-VMEM limit: >= default-ish everywhere, <= v7x physical."""
    return int(min(max(32 * 1024 * 1024, 2 * estimate_bytes), 48 * 1024 * 1024))


# ----------------------------------------------------------------------------
# Shared body math:
#   y = relu( (Ws@x + bs) + (W3@relu(W2@relu(W1@x + b1) + b2) + b3) )
# with Ws/W1 stacked into one (2*Cout, Cin) matmul against x.
# All dots are bf16 x bf16 with f32 accumulation.
# ----------------------------------------------------------------------------
def _body_math(x, wsb, bsb, w2, b2, w3, b3, cout):
    sb = jnp.dot(wsb, x, preferred_element_type=jnp.float32) + bsb   # (2*Cout, T)
    s = sb[:cout]                                                    # skip: Conv1x1+BN
    h = jnp.maximum(sb[cout:], 0.0).astype(jnp.bfloat16)             # bone1 + ReLU
    h = jnp.dot(w2, h, preferred_element_type=jnp.float32) + b2
    h = jnp.maximum(h, 0.0).astype(jnp.bfloat16)                     # bone2 + ReLU
    h = jnp.dot(w3, h, preferred_element_type=jnp.float32) + b3      # bone3
    return jnp.maximum(s + h, 0.0)                                   # relu(x1 + x2), f32


# ----------------------------------------------------------------------------
# Fused kernel: body + bilinear upsample via kron(Mh, Mw)^T, one batch image
# (and one output-pixel tile) per grid step.  y never touches HBM.
#   x block:    (Cin,  H*W)        bf16, pixels on the lane axis
#   kron block: (H*W,  tile_owo)   bf16, lane-dense
#   out block:  (Cout, tile_owo)   f32,  lane-dense stores
# ----------------------------------------------------------------------------
def _sm_fused_kernel(x_ref, wsb_ref, bsb_ref, w2_ref, b2_ref, w3_ref, b3_ref,
                     kt_ref, o_ref):
    cout = o_ref.shape[0]
    y = _body_math(x_ref[...], wsb_ref[...], bsb_ref[...], w2_ref[...],
                   b2_ref[...], w3_ref[...], b3_ref[...], cout)
    y = y.astype(jnp.bfloat16)                                       # (Cout, H*W)
    # Fused bilinear upsample: single lane-dense matmul (MXU otherwise idle).
    o_ref[...] = jnp.dot(y, kt_ref[...], preferred_element_type=jnp.float32)


def _fused_vmem_bytes(cin, cout, hw, t_owo):
    b = 2 * _vmem_tile_bytes(cin, hw, 2)                 # x block (bf16), 2 bufs
    b += 2 * _vmem_tile_bytes(hw, t_owo, 2)              # kron^T block (bf16)
    b += 2 * _vmem_tile_bytes(cout, t_owo, 4)            # output block (f32)
    b += 2 * (_vmem_tile_bytes(2 * cout, cin, 2) + _vmem_tile_bytes(2 * cout, 1, 4)
              + 2 * _vmem_tile_bytes(cout, cout, 2) + 2 * _vmem_tile_bytes(cout, 1, 4))
    b += 3 * _vmem_tile_bytes(2 * cout, hw, 4)            # live f32 intermediates
    return b


def _pick_owo_tiles(n, howo):
    """>= 2 total grid steps so both v7x TensorCores get work."""
    if n >= 2 or howo % 256 != 0:
        return 1
    return 2


def sm_fused(x_ncp, wsb, bsb, w2, b2, w3, b3, kt, *, owo_tiles, vmem_limit):
    n, cin, hw = x_ncp.shape
    cout = wsb.shape[0] // 2
    howo = kt.shape[1]
    assert howo % owo_tiles == 0
    t_owo = howo // owo_tiles

    def const(shape):
        return pl.BlockSpec(shape, lambda i, t: (0,) * len(shape))

    return pl.pallas_call(
        _sm_fused_kernel,
        out_shape=jax.ShapeDtypeStruct((n, cout, howo), jnp.float32),
        grid_spec=pltpu.PrefetchScalarGridSpec(
            num_scalar_prefetch=0,
            grid=(n, owo_tiles),
            in_specs=[
                pl.BlockSpec((None, cin, hw), lambda i, t: (i, 0, 0)),
                const((2 * cout, cin)), const((2 * cout, 1)),
                const((cout, cout)), const((cout, 1)),
                const((cout, cout)), const((cout, 1)),
                pl.BlockSpec((hw, t_owo), lambda i, t: (0, t)),
            ],
            out_specs=pl.BlockSpec((None, cout, t_owo), lambda i, t: (i, 0, t)),
        ),
        compiler_params=pltpu.CompilerParams(
            dimension_semantics=("parallel", "parallel"),
            vmem_limit_bytes=vmem_limit),
    )(x_ncp, wsb, bsb, w2, b2, w3, b3, kt)


# ----------------------------------------------------------------------------
# Fallback kernel 1 (large spatial): body only, pixel-tiled.  No host padding:
# grid uses pl.cdiv and the ragged last block's OOB stores are dropped.
# ----------------------------------------------------------------------------
def _sm_body_kernel(x_ref, wsb_ref, bsb_ref, w2_ref, b2_ref, w3_ref, b3_ref, o_ref):
    cout = o_ref.shape[0]
    o_ref[...] = _body_math(x_ref[...], wsb_ref[...], bsb_ref[...], w2_ref[...],
                            b2_ref[...], w3_ref[...], b3_ref[...], cout)


def _pick_tile_hw(n, hw, cin, cout, *, budget=12 * 1024 * 1024, max_tile=16384):
    def est(t):
        b = 2 * _vmem_tile_bytes(cin, t, 2)               # x block (bf16)
        b += 2 * _vmem_tile_bytes(cout, t, 4)              # out block (f32)
        b += 2 * (_vmem_tile_bytes(2 * cout, cin, 2) + _vmem_tile_bytes(2 * cout, 1, 4)
                  + 2 * _vmem_tile_bytes(cout, cout, 2) + 2 * _vmem_tile_bytes(cout, 1, 4))
        b += 3 * _vmem_tile_bytes(2 * cout, t, 4)          # live intermediates
        return b

    tile = min(max_tile, _round_up(hw, 128))
    while tile > 128 and est(tile) > budget:
        tile = max(128, _round_up(tile // 2, 128))
    # keep >= 2 total grid steps (v7x has 2 TensorCores)
    while n * pl.cdiv(hw, tile) < 2 and tile > 128:
        tile = max(128, _round_up(pl.cdiv(tile, 2), 128))
    return tile, est(tile)


def sm_body(x_ncp, wsb, bsb, w2, b2, w3, b3, *, tile_hw, vmem_limit):
    n, cin, hw = x_ncp.shape
    cout = wsb.shape[0] // 2

    def const(shape):
        return pl.BlockSpec(shape, lambda i, t: (0,) * len(shape))

    return pl.pallas_call(
        _sm_body_kernel,
        out_shape=jax.ShapeDtypeStruct((n, cout, hw), jnp.float32),
        grid_spec=pltpu.PrefetchScalarGridSpec(
            num_scalar_prefetch=0,
            grid=(n, pl.cdiv(hw, tile_hw)),
            in_specs=[
                pl.BlockSpec((None, cin, tile_hw), lambda i, t: (i, 0, t)),
                const((2 * cout, cin)), const((2 * cout, 1)),
                const((cout, cout)), const((cout, 1)),
                const((cout, cout)), const((cout, 1)),
            ],
            out_specs=pl.BlockSpec((None, cout, tile_hw), lambda i, t: (i, 0, t)),
        ),
        compiler_params=pltpu.CompilerParams(
            dimension_semantics=("parallel", "parallel"),
            vmem_limit_bytes=vmem_limit),
    )(x_ncp, wsb, bsb, w2, b2, w3, b3)


# ----------------------------------------------------------------------------
# Fallback kernel 2 (large spatial): separable align_corners=True bilinear
# upsample, Tp planes per step as per-plane 2D matmuls (no broadcast fill).
# ----------------------------------------------------------------------------
def _upsample_kernel(y_ref, mh_ref, mwT_ref, o_ref):
    tp = y_ref.shape[0]
    for p in range(tp):                                   # static unroll, small Tp
        t = jnp.dot(y_ref[p], mwT_ref[...], preferred_element_type=jnp.float32)
        o_ref[p] = jnp.dot(mh_ref[...], t, preferred_element_type=jnp.float32)


def _pick_plane_tile(nc, h, w, ho, wo, *, budget=10 * 1024 * 1024, max_tp=8):
    fixed = 2 * (_vmem_tile_bytes(ho, h, 4) + _vmem_tile_bytes(w, wo, 4))
    per_plane = (2 * _vmem_tile_bytes(h, w, 4) + 2 * _vmem_tile_bytes(ho, wo, 4)
                 + _vmem_tile_bytes(h, wo, 4))
    tp = max(1, min(max_tp, nc, (budget - fixed) // max(1, per_plane)))
    if nc > 1:
        tp = max(1, min(tp, (nc + 1) // 2))               # >= 2 grid steps
    return tp, fixed + tp * per_plane


def bilinear_upsample(y_planes, mh, mwT, *, tp, vmem_limit):
    nc, h, w = y_planes.shape
    ho, wo = mh.shape[0], mwT.shape[1]
    return pl.pallas_call(
        _upsample_kernel,
        out_shape=jax.ShapeDtypeStruct((nc, ho, wo), jnp.float32),
        grid_spec=pltpu.PrefetchScalarGridSpec(
            num_scalar_prefetch=0,
            grid=(pl.cdiv(nc, tp),),
            in_specs=[
                pl.BlockSpec((tp, h, w), lambda i: (i, 0, 0)),
                pl.BlockSpec((ho, h), lambda i: (0, 0)),
                pl.BlockSpec((w, wo), lambda i: (0, 0)),
            ],
            out_specs=pl.BlockSpec((tp, ho, wo), lambda i: (i, 0, 0)),
        ),
        compiler_params=pltpu.CompilerParams(
            dimension_semantics=("parallel",),
            vmem_limit_bytes=vmem_limit),
    )(y_planes, mh, mwT)


# ----------------------------------------------------------------------------
# Parameter setup / glue (plain JAX)
# ----------------------------------------------------------------------------
def fold_conv_bn(w, b, gamma, beta, mean, var, eps=1e-5):
    """Fold eval-mode BatchNorm into a 1x1 conv.  w: (Cout, Cin), b: (Cout,).
    Returns matmul layout: (Cout, Cin) weight, (Cout, 1) bias."""
    scale = gamma / jnp.sqrt(var + eps)
    w_eff = w * scale[:, None]
    b_eff = (b - mean) * scale + beta
    return w_eff, b_eff[:, None]


def make_conv_bn(key, cin, cout):
    k = jax.random.split(key, 6)
    w = jax.random.normal(k[0], (cout, cin), jnp.float32) * 0.2
    b = jax.random.normal(k[1], (cout,), jnp.float32) * 0.1
    gamma = 1.0 + 0.1 * jax.random.normal(k[2], (cout,), jnp.float32)
    beta = 0.1 * jax.random.normal(k[3], (cout,), jnp.float32)
    mean = 0.1 * jax.random.normal(k[4], (cout,), jnp.float32)
    var = jax.random.uniform(k[5], (cout,), jnp.float32, 0.5, 1.5)
    return fold_conv_bn(w, b, gamma, beta, mean, var)


def bilinear_matrix(n_in, n_out):
    """Interpolation matrix (n_out, n_in), align_corners=True (UpsamplingBilinear2d)."""
    if n_in == 1 or n_out == 1:   # degenerate: copy first sample (torch semantics)
        return jnp.zeros((n_out, n_in), jnp.float32).at[:, 0].set(1.0)
    src = jnp.arange(n_out, dtype=jnp.float32) * (n_in - 1) / (n_out - 1)
    i0 = jnp.clip(jnp.floor(src).astype(jnp.int32), 0, n_in - 1)
    i1 = jnp.clip(i0 + 1, 0, n_in - 1)
    frac = src - i0.astype(jnp.float32)
    return ((1.0 - frac)[:, None] * jax.nn.one_hot(i0, n_in, dtype=jnp.float32)
            + frac[:, None] * jax.nn.one_hot(i1, n_in, dtype=jnp.float32))


def _kron_upsample_matrix(mh, mw):
    """kron(Mh, Mw)^T as (H*W, Ho*Wo): out_flat = y_flat @ K^T (lane-dense)."""
    h, w = mh.shape[1], mw.shape[1]
    return jnp.einsum("oh,pw->hwop", mh, mw).reshape(h * w, -1)


_FUSED_VMEM_BUDGET = 24 * 1024 * 1024   # conservative across v5e/v6e/v7x


@functools.partial(jax.jit, static_argnames=("nscale",))
def sm_forward(x_nchw, params, nscale):
    (ws, bs), (w1, b1), (w2, b2), (w3, b3) = params
    n, cin, h, w = x_nchw.shape
    cout = ws.shape[0]
    hw = h * w
    ho, wo = h * nscale, w * nscale
    howo = ho * wo

    # bf16 at the kernel boundary (halves HBM bytes; in a full network the cast
    # fuses with the producing layer).  Biases stay f32; all dots accumulate f32.
    xb = x_nchw.reshape(n, cin, hw).astype(jnp.bfloat16)      # NCHW -> (N,Cin,HW), free
    wsb = jnp.concatenate([ws, w1], axis=0).astype(jnp.bfloat16)  # stacked skip+bone1
    bsb = jnp.concatenate([bs, b1], axis=0)
    w2b, w3b = w2.astype(jnp.bfloat16), w3.astype(jnp.bfloat16)

    mh = bilinear_matrix(h, ho)
    mw = bilinear_matrix(w, wo)

    owo_tiles = _pick_owo_tiles(n, howo)
    fused_bytes = _fused_vmem_bytes(cin, cout, hw, howo // owo_tiles)
    if fused_bytes <= _FUSED_VMEM_BUDGET:
        # Fused path: body + upsample in one kernel; y never round-trips HBM.
        kt = _kron_upsample_matrix(mh, mw).astype(jnp.bfloat16)
        out = sm_fused(xb, wsb, bsb, w2b, b2, w3b, b3, kt,
                       owo_tiles=owo_tiles, vmem_limit=_vmem_limit(fused_bytes))
        return out.reshape(n, cout, ho, wo)                    # NCHW, like torch

    # Fallback (large spatial): tiled body kernel + separable upsample kernel.
    tile_hw, body_bytes = _pick_tile_hw(n, hw, cin, cout)
    y = sm_body(xb, wsb, bsb, w2b, b2, w3b, b3,
                tile_hw=tile_hw, vmem_limit=_vmem_limit(body_bytes))
    y_planes = y.reshape(n * cout, h, w)                       # free reshape
    tp, up_bytes = _pick_plane_tile(n * cout, h, w, ho, wo)
    out_planes = bilinear_upsample(y_planes, mh, mw.T, tp=tp,
                                   vmem_limit=_vmem_limit(up_bytes))
    return out_planes.reshape(n, cout, ho, wo)


def sm_forward_ref(x_nchw, params, nscale):
    """Pure-JAX reference mirroring the kernel numerics (bf16 operands with f32
    accumulation, kron-form align_corners=True bilinear upsample)."""
    (ws, bs), (w1, b1), (w2, b2), (w3, b3) = params
    n, cin, h, w = x_nchw.shape
    cout = ws.shape[0]
    bf, f32 = jnp.bfloat16, jnp.float32
    xb = x_nchw.reshape(n, cin, h * w).astype(bf)
    s = jnp.einsum("oc,ncp->nop", ws.astype(bf), xb, preferred_element_type=f32) + bs[None]
    t = jnp.einsum("oc,ncp->nop", w1.astype(bf), xb, preferred_element_type=f32) + b1[None]
    t = jnp.maximum(t, 0.0).astype(bf)
    t = jnp.einsum("oc,ncp->nop", w2.astype(bf), t, preferred_element_type=f32) + b2[None]
    t = jnp.maximum(t, 0.0).astype(bf)
    t = jnp.einsum("oc,ncp->nop", w3.astype(bf), t, preferred_element_type=f32) + b3[None]
    y = jnp.maximum(s + t, 0.0).astype(bf)                     # (N, Cout, H*W)
    mh = bilinear_matrix(h, h * nscale)
    mw = bilinear_matrix(w, w * nscale)
    kt = _kron_upsample_matrix(mh, mw).astype(bf)
    out = jnp.einsum("ncp,pq->ncq", y, kt, preferred_element_type=f32)
    return out.reshape(n, cout, h * nscale, w * nscale)


if __name__ == "__main__":
    # Small shapes consistent with SM(nin, nout, nscale)
    N, nin, nout, H, W, nscale = 2, 4, 8, 16, 16, 2

    key = jax.random.PRNGKey(0)
    kx, ks, k1, k2, k3 = jax.random.split(key, 5)

    x = jax.random.normal(kx, (N, nin, H, W), jnp.float32)
    params = (
        make_conv_bn(ks, nin, nout),    # skip:  Conv1x1 + BN
        make_conv_bn(k1, nin, nout),    # bone1: Conv1x1 + BN (+ReLU)
        make_conv_bn(k2, nout, nout),   # bone2: Conv1x1 + BN (+ReLU)
        make_conv_bn(k3, nout, nout),   # bone3: Conv1x1 + BN
    )

    out = jax.block_until_ready(sm_forward(x, params, nscale))
    ref = sm_forward_ref(x, params, nscale)

    assert out.shape == (N, nout, H * nscale, W * nscale), out.shape
    # bf16 operands / f32 accumulation on both sides -> only accumulation-order noise.
    assert jnp.allclose(out, ref, atol=5e-3, rtol=5e-3), \
        float(jnp.max(jnp.abs(out - ref)))

    print("KERNEL_OK")
</pallas_src>

<mosaic_0001>
module attributes {stable_mosaic.version = 11 : i64} {
  func.func @_sm_fused_kernel(%arg0: i32, %arg1: i32, %arg2: memref<1x4x256xbf16, #tpu.memory_space<vmem>>, %arg3: memref<16x4xbf16, #tpu.memory_space<vmem>>, %arg4: memref<16x1xf32, #tpu.memory_space<vmem>>, %arg5: memref<8x8xbf16, #tpu.memory_space<vmem>>, %arg6: memref<8x1xf32, #tpu.memory_space<vmem>>, %arg7: memref<8x8xbf16, #tpu.memory_space<vmem>>, %arg8: memref<8x1xf32, #tpu.memory_space<vmem>>, %arg9: memref<256x1024xbf16, #tpu.memory_space<vmem>>, %arg10: memref<1x8x1024xf32, #tpu.memory_space<vmem>>) attributes {dimension_semantics = [#tpu.dimension_semantics<parallel>, #tpu.dimension_semantics<parallel>], iteration_bounds = array<i64: 2, 1>, scalar_prefetch = 0 : i64, scratch_operands = 0 : i64, tpu.core_type = #tpu.core_type<tc>, window_params = [{transform_indices = @transform_0, window_bounds = array<i64: 1, 4, 256>}, {pipeline_mode = #tpu.pipeline_mode<synchronous>, transform_indices = @transform_1, window_bounds = array<i64: 16, 4>}, {pipeline_mode = #tpu.pipeline_mode<synchronous>, transform_indices = @transform_2, window_bounds = array<i64: 16, 1>}, {pipeline_mode = #tpu.pipeline_mode<synchronous>, transform_indices = @transform_3, window_bounds = array<i64: 8, 8>}, {pipeline_mode = #tpu.pipeline_mode<synchronous>, transform_indices = @transform_4, window_bounds = array<i64: 8, 1>}, {pipeline_mode = #tpu.pipeline_mode<synchronous>, transform_indices = @transform_5, window_bounds = array<i64: 8, 8>}, {pipeline_mode = #tpu.pipeline_mode<synchronous>, transform_indices = @transform_6, window_bounds = array<i64: 8, 1>}, {transform_indices = @transform_7, window_bounds = array<i64: 256, 1024>}, {transform_indices = @transform_8, window_bounds = array<i64: 1, 8, 1024>}]} {
    %c0 = arith.constant 0 : index
    %c0_0 = arith.constant 0 : index
    %c0_1 = arith.constant 0 : index
    %0 = vector.load %arg2[%c0, %c0_0, %c0_1] : memref<1x4x256xbf16, #tpu.memory_space<vmem>>, vector<1x4x256xbf16>
    %1 = vector.shape_cast %0 : vector<1x4x256xbf16> to vector<4x256xbf16>
    %c0_2 = arith.constant 0 : index
    %c0_3 = arith.constant 0 : index
    %2 = vector.load %arg3[%c0_2, %c0_3] : memref<16x4xbf16, #tpu.memory_space<vmem>>, vector<16x4xbf16>
    %c0_4 = arith.constant 0 : index
    %c0_5 = arith.constant 0 : index
    %3 = vector.load %arg4[%c0_4, %c0_5] : memref<16x1xf32, #tpu.memory_space<vmem>>, vector<16x1xf32>
    %c0_6 = arith.constant 0 : index
    %c0_7 = arith.constant 0 : index
    %4 = vector.load %arg5[%c0_6, %c0_7] : memref<8x8xbf16, #tpu.memory_space<vmem>>, vector<8x8xbf16>
    %c0_8 = arith.constant 0 : index
    %c0_9 = arith.constant 0 : index
    %5 = vector.load %arg6[%c0_8, %c0_9] : memref<8x1xf32, #tpu.memory_space<vmem>>, vector<8x1xf32>
    %c0_10 = arith.constant 0 : index
    %c0_11 = arith.constant 0 : index
    %6 = vector.load %arg7[%c0_10, %c0_11] : memref<8x8xbf16, #tpu.memory_space<vmem>>, vector<8x8xbf16>
    %c0_12 = arith.constant 0 : index
    %c0_13 = arith.constant 0 : index
    %7 = vector.load %arg8[%c0_12, %c0_13] : memref<8x1xf32, #tpu.memory_space<vmem>>, vector<8x1xf32>
    %cst = arith.constant dense<0.000000e+00> : vector<16x256xf32>
    %8 = tpu.matmul %2, %1, %cst {dimension_numbers = #tpu.dot_dimension_numbers<[1], [0], [0], [1], [0, 0, 1, 1], [], []>} : vector<16x4xbf16>, vector<4x256xbf16>, vector<16x256xf32> -> vector<16x256xf32>
    %9 = vector.broadcast %3 : vector<16x1xf32> to vector<16x256xf32>
    %10 = arith.addf %8, %9 : vector<16x256xf32>
    %11 = vector.extract_strided_slice %10 {offsets = [0, 0], sizes = [8, 256], strides = [1, 1]} : vector<16x256xf32> to vector<8x256xf32>
    %12 = vector.extract_strided_slice %10 {offsets = [8, 0], sizes = [8, 256], strides = [1, 1]} : vector<16x256xf32> to vector<8x256xf32>
    %cst_14 = arith.constant 0.000000e+00 : f32
    %13 = vector.broadcast %cst_14 : f32 to vector<8x256xf32>
    %14 = arith.maximumf %12, %13 : vector<8x256xf32>
    %15 = arith.truncf %14 : vector<8x256xf32> to vector<8x256xbf16>
    %cst_15 = arith.constant dense<0.000000e+00> : vector<8x256xf32>
    %16 = tpu.matmul %4, %15, %cst_15 {dimension_numbers = #tpu.dot_dimension_numbers<[1], [0], [0], [1], [0, 0, 1, 1], [], []>} : vector<8x8xbf16>, vector<8x256xbf16>, vector<8x256xf32> -> vector<8x256xf32>
    %17 = vector.broadcast %5 : vector<8x1xf32> to vector<8x256xf32>
    %18 = arith.addf %16, %17 : vector<8x256xf32>
    %cst_16 = arith.constant 0.000000e+00 : f32
    %19 = vector.broadcast %cst_16 : f32 to vector<8x256xf32>
    %20 = arith.maximumf %18, %19 : vector<8x256xf32>
    %21 = arith.truncf %20 : vector<8x256xf32> to vector<8x256xbf16>
    %cst_17 = arith.constant dense<0.000000e+00> : vector<8x256xf32>
    %22 = tpu.matmul %6, %21, %cst_17 {dimension_numbers = #tpu.dot_dimension_numbers<[1], [0], [0], [1], [0, 0, 1, 1], [], []>} : vector<8x8xbf16>, vector<8x256xbf16>, vector<8x256xf32> -> vector<8x256xf32>
    %23 = vector.broadcast %7 : vector<8x1xf32> to vector<8x256xf32>
    %24 = arith.addf %22, %23 : vector<8x256xf32>
    %25 = arith.addf %11, %24 : vector<8x256xf32>
    %cst_18 = arith.constant 0.000000e+00 : f32
    %26 = vector.broadcast %cst_18 : f32 to vector<8x256xf32>
    %27 = arith.maximumf %25, %26 : vector<8x256xf32>
    %28 = arith.truncf %27 : vector<8x256xf32> to vector<8x256xbf16>
    %c0_19 = arith.constant 0 : index
    %c0_20 = arith.constant 0 : index
    %29 = vector.load %arg9[%c0_19, %c0_20] : memref<256x1024xbf16, #tpu.memory_space<vmem>>, vector<256x1024xbf16>
    %cst_21 = arith.constant dense<0.000000e+00> : vector<8x1024xf32>
    %30 = tpu.matmul %28, %29, %cst_21 {dimension_numbers = #tpu.dot_dimension_numbers<[1], [0], [0], [1], [0, 0, 1, 1], [], []>} : vector<8x256xbf16>, vector<256x1024xbf16>, vector<8x1024xf32> -> vector<8x1024xf32>
    %c0_22 = arith.constant 0 : index
    %c0_23 = arith.constant 0 : index
    %c0_24 = arith.constant 0 : index
    %31 = vector.load %arg10[%c0_22, %c0_23, %c0_24] : memref<1x8x1024xf32, #tpu.memory_space<vmem>>, vector<1x8x1024xf32>
    %32 = vector.shape_cast %31 : vector<1x8x1024xf32> to vector<8x1024xf32>
    %33 = vector.shape_cast %30 : vector<8x1024xf32> to vector<1x8x1024xf32>
    tpu.vector_store %arg10[%c0_22, %c0_23, %c0_24], %33 {strides = array<i32>} : memref<1x8x1024xf32, #tpu.memory_space<vmem>>, vector<1x8x1024xf32>,
    return
  }
  func.func @transform_0(%arg0: i32, %arg1: i32) -> (i32, i32, i32) {
    %c0_i32 = arith.constant 0 : i32
    %c0_i32_0 = arith.constant 0 : i32
    %c0_i32_1 = arith.constant 0 : i32
    return %arg0, %c0_i32, %c0_i32_0 : i32, i32, i32
  }
  func.func @transform_1(%arg0: i32, %arg1: i32) -> (i32, i32) {
    %c0_i32 = arith.constant 0 : i32
    %c0_i32_0 = arith.constant 0 : i32
    %c0_i32_1 = arith.constant 0 : i32
    return %c0_i32, %c0_i32_0 : i32, i32
  }
  func.func @transform_2(%arg0: i32, %arg1: i32) -> (i32, i32) {
    %c0_i32 = arith.constant 0 : i32
    %c0_i32_0 = arith.constant 0 : i32
    %c0_i32_1 = arith.constant 0 : i32
    return %c0_i32, %c0_i32_0 : i32, i32
  }
  func.func @transform_3(%arg0: i32, %arg1: i32) -> (i32, i32) {
    %c0_i32 = arith.constant 0 : i32
    %c0_i32_0 = arith.constant 0 : i32
    %c0_i32_1 = arith.constant 0 : i32
    return %c0_i32, %c0_i32_0 : i32, i32
  }
  func.func @transform_4(%arg0: i32, %arg1: i32) -> (i32, i32) {
    %c0_i32 = arith.constant 0 : i32
    %c0_i32_0 = arith.constant 0 : i32
    %c0_i32_1 = arith.constant 0 : i32
    return %c0_i32, %c0_i32_0 : i32, i32
  }
  func.func @transform_5(%arg0: i32, %arg1: i32) -> (i32, i32) {
    %c0_i32 = arith.constant 0 : i32
    %c0_i32_0 = arith.constant 0 : i32
    %c0_i32_1 = arith.constant 0 : i32
    return %c0_i32, %c0_i32_0 : i32, i32
  }
  func.func @transform_6(%arg0: i32, %arg1: i32) -> (i32, i32) {
    %c0_i32 = arith.constant 0 : i32
    %c0_i32_0 = arith.constant 0 : i32
    %c0_i32_1 = arith.constant 0 : i32
    return %c0_i32, %c0_i32_0 : i32, i32
  }
  func.func @transform_7(%arg0: i32, %arg1: i32) -> (i32, i32) {
    %c0_i32 = arith.constant 0 : i32
    %c0_i32_0 = arith.constant 0 : i32
    return %c0_i32, %arg1 : i32, i32
  }
  func.func @transform_8(%arg0: i32, %arg1: i32) -> (i32, i32, i32) {
    %c0_i32 = arith.constant 0 : i32
    %c0_i32_0 = arith.constant 0 : i32
    return %arg0, %c0_i32, %arg1 : i32, i32, i32
  }
}

</mosaic_0001>

<llo_original>
// kernel: sm_forward.1
$region0: #{sm_forward.1}
  #allocation0 [shape = 'u32[]', space=smem, size = 0x4, offset = 0x4, fixed_abs, tag = 'smem constant byte address 0x4 - core index']
  #allocation1 [shape = 'u32[144,128]{1,0:T(1,128)}', space=vmem, size = 0x12000, scoped, tag = 'internal scratch']
  %s0 = inlined_call_operand.vmem [shape: bf16[2,4,256], index: 0, kind: input, shape index: {}]
  %s1 = inlined_call_operand.vmem [shape: bf16[16,4], index: 1, kind: input, shape index: {}]
  %s2 = inlined_call_operand.vmem [shape: f32[16,1], index: 2, kind: input, shape index: {}]
  %s3 = inlined_call_operand.vmem [shape: bf16[8,8], index: 3, kind: input, shape index: {}]
  %s4 = inlined_call_operand.vmem [shape: f32[8,1], index: 4, kind: input, shape index: {}]
  %s5 = inlined_call_operand.vmem [shape: bf16[8,8], index: 5, kind: input, shape index: {}]
  %s6 = inlined_call_operand.vmem [shape: f32[8,1], index: 6, kind: input, shape index: {}]
  %s7 = inlined_call_operand.vmem [shape: bf16[256,1024], index: 7, kind: input, shape index: {}]
  %s8 = inlined_call_operand.vmem [shape: f32[2,8,1024], index: 8, kind: output, shape index: {}]
  %s9 = sld [smem:[#allocation0]]
  $region65: #{sm_forward.1} parent=0
    _
  %s11 = ssub.s32 1, %s9
  %s12 = scalar_select 0, %s11, %s9
  loop: start=0, step=1, limit=4
  $region2: #{sm_forward.1} parent=0 // loop_pre_header
    _
  $region3: #{sm_forward.1} parent=0 // loop_header
    %s14 = sphi 0, %s18
    %p15 = scmp.ge.s32.totalorder %s14, 4
    %s21 = sphi 0, %s33
    %s22 = sphi 0, %s29
    %s23 = sphi 0, %s21
    %s24 = sphi 0, %s22
    %s25 = sphi 0, %s23
    %s26 = sphi 0, %s24
    %s36 = sphi 0, %s38
    %s39 = sphi 0, %s36
    %s40 = sphi 0, %s39
    %s56 = sphi 0, %s40
    %s60 = sphi 0, %s60
    %s62 = sphi 0, %s60
    %s63 = sphi 0, %s62
    %s77 = sphi 0, %s63
    %s81 = sphi 0, %s81
    %s83 = sphi 0, %s81
    %s84 = sphi 0, %s83
    %s98 = sphi 0, %s84
    %s102 = sphi 0, %s102
    %s104 = sphi 0, %s102
    %s105 = sphi 0, %s104
    %s119 = sphi 0, %s105
    %s123 = sphi 0, %s123
    %s125 = sphi 0, %s123
    %s126 = sphi 0, %s125
    %s140 = sphi 0, %s126
    %s144 = sphi 0, %s144
    %s146 = sphi 0, %s144
    %s147 = sphi 0, %s146
    %s161 = sphi 0, %s147
    %s165 = sphi 0, %s165
    %s167 = sphi 0, %s165
    %s168 = sphi 0, %s167
    %s182 = sphi 0, %s168
    %s188 = sphi 0, %s190
    %s191 = sphi 0, %s188
    %s192 = sphi 0, %s191
    %s208 = sphi 0, %s192
    %s216 = sphi 0, %s218
    %s219 = sphi 0, %s216
    %s220 = sphi 0, %s219
    %s236 = sphi 0, %s220
  $region4: #{sm_forward.1} parent=0 // loop_header_branch
    %17 = sbr.rel (%p15) target = $region8
  $region5: #{sm_forward.1} parent=0 // loop_body
    %s19 = ssub.s32 %s14, 1
    %s20 = ssub.s32 %s14, 2
    %s27 = sadd.s32 1, %s22
    %p28 = scmp.ge.s32.totalorder %s27, 1
    %s29 = scalar_select %p28, 0, %s27
    %s30 = sadd.s32 1, %s21
    %s31 = scalar_select %p28, %s30, %s21
    %p32 = scmp.ge.s32.totalorder %s31, 2
    %s33 = scalar_select %p32, 0, %s31
    %s34 = ssub.s32 %s21, %s33
    %p35 = scmp.eq.s32.totalorder %s34, 0
    %s37 = sadd.s32 %s36, 1
    %s38 = scalar_select %p35, %s36, %s37
    %p41 = pneg %p35
    %p42 = scmp.eq.s32.totalorder %s14, 1
    %p43 = por %p41, %p42
    %p44 = scmp.ne.s32.totalorder %s36, %s39
    %p45 = scmp.eq.s32.totalorder %s14, 0
    %p46 = por %p44, %p45
    %p47 = scmp.ne.s32.totalorder %s36, %s39
    %p48 = scmp.eq.s32.totalorder %s19, 1
    %p49 = por %p47, %p48
    %p50 = scmp.ne.s32.totalorder %s39, %s40
    %p51 = scmp.eq.s32.totalorder %s19, 0
    %p52 = por %p50, %p51
    %p53 = scmp.ne.s32.totalorder %s39, %s40
    %p54 = scmp.eq.s32.totalorder %s20, 1
    %p55 = por %p53, %p54
    %p57 = scmp.ne.s32.totalorder %s40, %s56
    %p58 = scmp.eq.s32.totalorder %s20, 0
    %p59 = por %p57, %p58
    %s61 = sadd.s32 %s60, 1
    %p64 = scmp.eq.s32.totalorder %s14, 1
    %p65 = scmp.ne.s32.totalorder %s60, %s62
    %p66 = scmp.eq.s32.totalorder %s14, 0
    %p67 = por %p65, %p66
    %p68 = scmp.ne.s32.totalorder %s60, %s62
    %p69 = scmp.eq.s32.totalorder %s19, 1
    %p70 = por %p68, %p69
    %p71 = scmp.ne.s32.totalorder %s62, %s63
    %p72 = scmp.eq.s32.totalorder %s19, 0
    %p73 = por %p71, %p72
    %p74 = scmp.ne.s32.totalorder %s62, %s63
    %p75 = scmp.eq.s32.totalorder %s20, 1
    %p76 = por %p74, %p75
    %p78 = scmp.ne.s32.totalorder %s63, %s77
    %p79 = scmp.eq.s32.totalorder %s20, 0
    %p80 = por %p78, %p79
    %s82 = sadd.s32 %s81, 1
    %p85 = scmp.eq.s32.totalorder %s14, 1
    %p86 = scmp.ne.s32.totalorder %s81, %s83
    %p87 = scmp.eq.s32.totalorder %s14, 0
    %p88 = por %p86, %p87
    %p89 = scmp.ne.s32.totalorder %s81, %s83
    %p90 = scmp.eq.s32.totalorder %s19, 1
    %p91 = por %p89, %p90
    %p92 = scmp.ne.s32.totalorder %s83, %s84
    %p93 = scmp.eq.s32.totalorder %s19, 0
    %p94 = por %p92, %p93
    %p95 = scmp.ne.s32.totalorder %s83, %s84
    %p96 = scmp.eq.s32.totalorder %s20, 1
    %p97 = por %p95, %p96
    %p99 = scmp.ne.s32.totalorder %s84, %s98
    %p100 = scmp.eq.s32.totalorder %s20, 0
    %p101 = por %p99, %p100
    %s103 = sadd.s32 %s102, 1
    %p106 = scmp.eq.s32.totalorder %s14, 1
    %p107 = scmp.ne.s32.totalorder %s102, %s104
    %p108 = scmp.eq.s32.totalorder %s14, 0
    %p109 = por %p107, %p108
    %p110 = scmp.ne.s32.totalorder %s102, %s104
    %p111 = scmp.eq.s32.totalorder %s19, 1
    %p112 = por %p110, %p111
    %p113 = scmp.ne.s32.totalorder %s104, %s105
    %p114 = scmp.eq.s32.totalorder %s19, 0
    %p115 = por %p113, %p114
    %p116 = scmp.ne.s32.totalorder %s104, %s105
    %p117 = scmp.eq.s32.totalorder %s20, 1
    %p118 = por %p116, %p117
    %p120 = scmp.ne.s32.totalorder %s105, %s119
    %p121 = scmp.eq.s32.totalorder %s20, 0
    %p122 = por %p120, %p121
    %s124 = sadd.s32 %s123, 1
    %p127 = scmp.eq.s32.totalorder %s14, 1
    %p128 = scmp.ne.s32.totalorder %s123, %s125
    %p129 = scmp.eq.s32.totalorder %s14, 0
    %p130 = por %p128, %p129
    %p131 = scmp.ne.s32.totalorder %s123, %s125
    %p132 = scmp.eq.s32.totalorder %s19, 1
    %p133 = por %p131, %p132
    %p134 = scmp.ne.s32.totalorder %s125, %s126
    %p135 = scmp.eq.s32.totalorder %s19, 0
    %p136 = por %p134, %p135
    %p137 = scmp.ne.s32.totalorder %s125, %s126
    %p138 = scmp.eq.s32.totalorder %s20, 1
    %p139 = por %p137, %p138
    %p141 = scmp.ne.s32.totalorder %s126, %s140
    %p142 = scmp.eq.s32.totalorder %s20, 0
    %p143 = por %p141, %p142
    %s145 = sadd.s32 %s144, 1
    %p148 = scmp.eq.s32.totalorder %s14, 1
    %p149 = scmp.ne.s32.totalorder %s144, %s146
    %p150 = scmp.eq.s32.totalorder %s14, 0
    %p151 = por %p149, %p150
    %p152 = scmp.ne.s32.totalorder %s144, %s146
    %p153 = scmp.eq.s32.totalorder %s19, 1
    %p154 = por %p152, %p153
    %p155 = scmp.ne.s32.totalorder %s146, %s147
    %p156 = scmp.eq.s32.totalorder %s19, 0
    %p157 = por %p155, %p156
    %p158 = scmp.ne.s32.totalorder %s146, %s147
    %p159 = scmp.eq.s32.totalorder %s20, 1
    %p160 = por %p158, %p159
    %p162 = scmp.ne.s32.totalorder %s147, %s161
    %p163 = scmp.eq.s32.totalorder %s20, 0
    %p164 = por %p162, %p163
    %s166 = sadd.s32 %s165, 1
    %p169 = scmp.eq.s32.totalorder %s14, 1
    %p170 = scmp.ne.s32.totalorder %s165, %s167
    %p171 = scmp.eq.s32.totalorder %s14, 0
    %p172 = por %p170, %p171
    %p173 = scmp.ne.s32.totalorder %s165, %s167
    %p174 = scmp.eq.s32.totalorder %s19, 1
    %p175 = por %p173, %p174
    %p176 = scmp.ne.s32.totalorder %s167, %s168
    %p177 = scmp.eq.s32.totalorder %s19, 0
    %p178 = por %p176, %p177
    %p179 = scmp.ne.s32.totalorder %s167, %s168
    %p180 = scmp.eq.s32.totalorder %s20, 1
    %p181 = por %p179, %p180
    %p183 = scmp.ne.s32.totalorder %s168, %s182
    %p184 = scmp.eq.s32.totalorder %s20, 0
    %p185 = por %p183, %p184
    %s186 = ssub.s32 %s22, %s29
    %p187 = scmp.eq.s32.totalorder %s186, 0
    %s189 = sadd.s32 %s188, 1
    %s190 = scalar_select %p187, %s188, %s189
    %p193 = pneg %p187
    %p194 = scmp.eq.s32.totalorder %s14, 1
    %p195 = por %p193, %p194
    %p196 = scmp.ne.s32.totalorder %s188, %s191
    %p197 = scmp.eq.s32.totalorder %s14, 0
    %p198 = por %p196, %p197
    %p199 = scmp.ne.s32.totalorder %s188, %s191
    %p200 = scmp.eq.s32.totalorder %s19, 1
    %p201 = por %p199, %p200
    %p202 = scmp.ne.s32.totalorder %s191, %s192
    %p203 = scmp.eq.s32.totalorder %s19, 0
    %p204 = por %p202, %p203
    %p205 = scmp.ne.s32.totalorder %s191, %s192
    %p206 = scmp.eq.s32.totalorder %s20, 1
    %p207 = por %p205, %p206
    %p209 = scmp.ne.s32.totalorder %s192, %s208
    %p210 = scmp.eq.s32.totalorder %s20, 0
    %p211 = por %p209, %p210
    %s212 = ssub.s32 %s21, %s33
    %s213 = ssub.s32 %s22, %s29
    %s214 = sor.u32 %s212, %s213
    %p215 = scmp.eq.s32.totalorder %s214, 0
    %s217 = sadd.s32 %s216, 1
    %s218 = scalar_select %p215, %s216, %s217
    %p221 = pneg %p215
    %p222 = scmp.eq.s32.totalorder %s14, 1
    %p223 = por %p221, %p222
    %p224 = scmp.ne.s32.totalorder %s216, %s219
    %p225 = scmp.eq.s32.totalorder %s14, 0
    %p226 = por %p224, %p225
    %p227 = scmp.ne.s32.totalorder %s216, %s219
    %p228 = scmp.eq.s32.totalorder %s19, 1
    %p229 = por %p227, %p228
    %p230 = scmp.ne.s32.totalorder %s219, %s220
    %p231 = scmp.eq.s32.totalorder %s19, 0
    %p232 = por %p230, %p231
    %p233 = scmp.ne.s32.totalorder %s219, %s220
    %p234 = scmp.eq.s32.totalorder %s20, 1
    %p235 = por %p233, %p234
    %p237 = scmp.ne.s32.totalorder %s220, %s236
    %p238 = scmp.eq.s32.totalorder %s20, 0
    %p239 = por %p237, %p238
    %p240 = scmp.le.s32.totalorder 1, %s14
    %p241 = scmp.lt.s32.totalorder %s14, 3
    %p242 = pnand %p240, %p241
    %p243 = pneg %p242
    // Predicated region
    $region9: #{sm_forward.1} parent=5 // pred_check
      _
    $region10: #{sm_forward.1} parent=5 // pred_check_branch
      %245 = sbr.rel (%p242) target = $region12
    $region11: #{sm_forward.1} parent=5 // pred_region
      %s246 = ssub.s32 %s14, 1
      // Predicated region
      $region13: #{sm_forward.1} parent=11 // pred_check
        %p247 = pneg %p73
      $region14: #{sm_forward.1} parent=11 // pred_check_branch
        %249 = sbr.rel (%p247) target = $region16
      $region15: #{sm_forward.1} parent=11 // pred_region
        _
      $region16: #{sm_forward.1} parent=11 // pred_fallthru
        _
      // Predicated region
      $region17: #{sm_forward.1} parent=11 // pred_check
        %p250 = pneg %p94
      $region18: #{sm_forward.1} parent=11 // pred_check_branch
        %252 = sbr.rel (%p250) target = $region20
      $region19: #{sm_forward.1} parent=11 // pred_region
        _
      $region20: #{sm_forward.1} parent=11 // pred_fallthru
        _
      // Predicated region
      $region21: #{sm_forward.1} parent=11 // pred_check
        %p253 = pneg %p115
      $region22: #{sm_forward.1} parent=11 // pred_check_branch
        %255 = sbr.rel (%p253) target = $region24
      $region23: #{sm_forward.1} parent=11 // pred_region
        _
      $region24: #{sm_forward.1} parent=11 // pred_fallthru
        _
      // Predicated region
      $region25: #{sm_forward.1} parent=11 // pred_check
        %p256 = pneg %p136
      $region26: #{sm_forward.1} parent=11 // pred_check_branch
        %258 = sbr.rel (%p256) target = $region28
      $region27: #{sm_forward.1} parent=11 // pred_region
        _
      $region28: #{sm_forward.1} parent=11 // pred_fallthru
        _
      // Predicated region
      $region29: #{sm_forward.1} parent=11 // pred_check
        %p259 = pneg %p157
      $region30: #{sm_forward.1} parent=11 // pred_check_branch
        %261 = sbr.rel (%p259) target = $region32
      $region31: #{sm_forward.1} parent=11 // pred_region
        _
      $region32: #{sm_forward.1} parent=11 // pred_fallthru
        _
      // Predicated region
      $region33: #{sm_forward.1} parent=11 // pred_check
        %p262 = pneg %p178
      $region34: #{sm_forward.1} parent=11 // pred_check_branch
        %264 = sbr.rel (%p262) target = $region36
      $region35: #{sm_forward.1} parent=11 // pred_region
        _
      $region36: #{sm_forward.1} parent=11 // pred_fallthru
        _
      // Predicated region
      $region37: #{sm_forward.1} parent=11 // pred_check
        %p265 = pneg %p204
      $region38: #{sm_forward.1} parent=11 // pred_check_branch
        %267 = sbr.rel (%p265) target = $region40
      $region39: #{sm_forward.1} parent=11 // pred_region
        %s268 = smul.u32 8, %s24
        %p269 = scmp.lt.s32.totalorder %s268, 7
        %s270 = scalar_select %p269, %s268, 7
        %s271 = smul.addr %s270, 4
        %s272 = scalar_lea.vmem %s7, %s271
        %s273 = smul.u32 8, %s24
      $region40: #{sm_forward.1} parent=11 // pred_fallthru
        _
    $region12: #{sm_forward.1} parent=5 // pred_fallthru
      _
    %p274 = scmp.lt.s32.totalorder %s14, 2
    // Predicated region
    $region41: #{sm_forward.1} parent=5 // pred_check
      %p275 = pneg %p274
    $region42: #{sm_forward.1} parent=5 // pred_check_branch
      %277 = sbr.rel (%p275) target = $region44
    $region43: #{sm_forward.1} parent=5 // pred_region
      // Predicated region
      $region45: #{sm_forward.1} parent=43 // pred_check
        %p278 = pneg %p46
      $region46: #{sm_forward.1} parent=43 // pred_check_branch
        %280 = sbr.rel (%p278) target = $region48
      $region47: #{sm_forward.1} parent=43 // pred_region
        %p281 = scmp.lt.s32.totalorder %s21, 1
        %s282 = scalar_select %p281, %s21, 1
        %s283 = smul.addr %s282, 2
        %s284 = smul.addr %s283, 2
        %s285 = scalar_lea.vmem %s0, %s284
      $region48: #{sm_forward.1} parent=43 // pred_fallthru
        _
    $region44: #{sm_forward.1} parent=5 // pred_fallthru
      _
    %p286 = scmp.le.s32.totalorder 1, %s14
    %p287 = scmp.lt.s32.totalorder %s14, 3
    %p288 = pnand %p286, %p287
    %p289 = pneg %p288
    // Predicated region
    $region49: #{sm_forward.1} parent=5 // pred_check
      _
    $region50: #{sm_forward.1} parent=5 // pred_check_branch
      %291 = sbr.rel (%p288) target = $region52
    $region51: #{sm_forward.1} parent=5 // pred_region
      %s292 = ssub.s32 %s14, 1
      %p293 = scmp.lt.s32.totalorder %s23, 1
      %s294 = scalar_select %p293, %s23, 1
      %s295 = smul.addr %s294, 2
      %s296 = smul.addr %s295, 2
      %s297 = scalar_lea.vmem %s0, %s296
      %p298 = pneg %p52
      %p299 = pneg %p49
      %p300 = pneg %p73
      %p301 = pneg %p70
      %p302 = pneg %p94
      %p303 = pneg %p91
      %p304 = pneg %p115
      %p305 = pneg %p112
      %p306 = pneg %p136
      %p307 = pneg %p133
      %p308 = pneg %p157
      %p309 = pneg %p154
      %p310 = pneg %p178
      %p311 = pneg %p175
      %s312 = smul.u32 8, %s24
      %p313 = scmp.lt.s32.totalorder %s312, 7
      %s314 = scalar_select %p313, %s312, 7
      %s315 = smul.addr %s314, 4
      %s316 = scalar_lea.vmem %s7, %s315
      %p317 = pneg %p204
      %p318 = pneg %p201
      %p319 = pneg %p232
      %p320 = pneg %p229
      %s321 = smul.u32 8, %s24
      %p322 = scmp.lt.s32.totalorder %s23, 1
      %s323 = scalar_select %p322, %s23, 1
      %p324 = scmp.lt.s32.totalorder %s321, 7
      %s325 = scalar_select %p324, %s321, 7
      %s326 = smul.addr %s323, 8
      %s327 = sadd.s32 %s325, %s326
      %s328 = smul.addr %s327, 8
      %s329 = scalar_lea.vmem %s8, %s328
      %p330 = scmp.lt.s32.totalorder %s23, 1
      %s331 = scalar_select %p330, %s23, 1
      %s332 = smul.addr %s331, 2
      %s333 = smul.addr %s332, 2
      %s334 = scalar_lea.vmem %s0, %s333
      %s335 = smul.u32 8, %s24
      %p336 = scmp.lt.s32.totalorder %s335, 7
      %s337 = scalar_select %p336, %s335, 7
      %s338 = smul.addr %s337, 4
      %s339 = scalar_lea.vmem %s7, %s338
      %s340 = smul.u32 8, %s24
      %s341 = smul.u32 8, %s24
      %p342 = scmp.lt.s32.totalorder %s23, 1
      %s343 = scalar_select %p342, %s23, 1
      %p344 = scmp.lt.s32.totalorder %s341, 7
      %s345 = scalar_select %p344, %s341, 7
      %s346 = smul.addr %s343, 8
      %s347 = sadd.s32 %s345, %s346
      %s348 = smul.addr %s347, 8
      %s349 = scalar_lea.vmem %s8, %s348
      %s350 = smul.u32 8, %s24
      %v352 = vld [vmem:[%s334] sm:$0xf]
      %v353 = vld [vmem:[%s1] sm:$0xf]
      %v354 = vld [vmem:[%s1 + $0x4] sm:$0xf]
      %v355 = vld [vmem:[%s2] sm:$0xff]
      %v356 = vld [vmem:[%s2 + $0x8] sm:$0xff]
      %v357 = vld [vmem:[%s3] sm:$0xf]
      %v358 = vld [vmem:[%s4] sm:$0xff]
      %v359 = vld [vmem:[%s5] sm:$0xf]
      %v360 = vld [vmem:[%s6] sm:$0xff]
      %362 = vset.pattern.permute.xlu0 0
      %363 = vperm.xlu0 %362, %v355
      %v364 = vpop.permute.xlu0 %363
      %367 = vset.pattern.permute.xlu0 0
      %368 = vperm.xlu0 %367, %v356
      %v369 = vpop.permute.xlu0 %368
      %v373 = vunpack.c.l.b16 %v353
      %v374 = vunpack.c.l.b16 %v354
      %v375 = vpack.c.b16 %v374, %v373
      %v378 = vunpack.c.l.s4 1983009808
      %v379 = vunpack.c.0.s8 %v378
      %v380 = vlaneseq
      %v381 = vshrl.u32 %v380, 7
      %v382 = vsub.s32 %v379, %v381
      %v383 = vrot.slane %v352, %v382
      %v384 = vcombine.high %v383, %v383
      %vm385 = vcmask 31744
      %v387 = vsel %vm385, %v375, 0
      %vm389 = vcmask 1041408
      %v391 = vsel %vm389, %v383, 0
      %v394 = vsel %vm389, %v384, 0
      %396 = vmatprep.subr.bf16.mxu0 %v394
      %397 = vmatpush1.bf16.msra.mxu0 %v391
      %398 = vmatprep.subr.bf16.mxu0 0
      %399 = vmatpush1.bf16.msra.mxu0 0
      %400 = vmatprep.subr.bf16.mxu0 0
      %401 = vmatpush1.bf16.msra.mxu0 0
      %402 = vmatprep.subr.bf16.mxu0 0
      %403 = vmatpush1.bf16.msra.mxu0 0
      %404 = vmatprep.subr.bf16.mxu0 0
      %405 = vmatpush1.bf16.msra.mxu0 0
      %406 = vmatprep.subr.bf16.mxu0 0
      %407 = vmatpush1.bf16.msra.mxu0 0
      %408 = vmatprep.subr.bf16.mxu0 0
      %409 = vmatpush1.bf16.msra.mxu0 0
      %410 = vmatprep.subr.bf16.mxu0 0
      %411 = vmatpush1.bf16.msra.mxu0 0
      %412 = vmatprep.subr.bf16.mxu0 0
      %413 = vmatpush1.bf16.msra.mxu0 0
      %414 = vmatprep.subr.bf16.mxu0 0
      %415 = vmatpush1.bf16.msra.mxu0 0
      %416 = vmatprep.subr.bf16.mxu0 0
      %417 = vmatpush1.bf16.msra.mxu0 0
      %418 = vmatprep.subr.bf16.mxu0 0
      %419 = vmatpush1.bf16.msra.mxu0 0
      %420 = vmatprep.subr.bf16.mxu0 0
      %421 = vmatpush1.bf16.msra.mxu0 0
      %422 = vmatprep.subr.bf16.mxu0 0
      %423 = vmatpush1.bf16.msra.mxu0 0
      %424 = vmatprep.subr.bf16.mxu0 0
      %425 = vmatpush1.bf16.msra.mxu0 0
      %426 = vmatprep.subr.bf16.mxu0 0
      %427 = vmatpush1.bf16.msra.mxu0 0
      %428 = vmatprep.mubr.bf16.mxu0 0
      %429 = vmatmul.mubr.bf16.gmra.mrb[0].mxu0 %v387
      %v430 = vpop.f32.mrb[0].mxu0
      %v431 = vadd.f32 %v364, %v430
      %v432 = vpop.f32.mrb[0].mxu0
      %v433 = vadd.f32 %v364, %v432
      %v434 = vpop.f32.mrb[0].mxu0
      %v435 = vadd.f32 %v369, %v434
      %v436 = vpop.f32.mrb[0].mxu0
      %v437 = vadd.f32 %v369, %v436
      %438 = vdwg.mxu0
      %v439 = vmax.f32 %v435, 0.0
      %v440 = vmax.f32 %v437, 0.0
      %v441 = vpack.c.bf16 %v439, %v439
      %v442 = vpack.c.bf16 %v440, %v440
      %444 = vset.pattern.permute.xlu0 0
      %445 = vperm.xlu0 %444, %v358
      %v446 = vpop.permute.xlu0 %445
      %vm448 = vcmask 64512
      %v450 = vsel %vm448, %v357, 0
      %vm452 = vcmask 1043456
      %v454 = vsel %vm452, %v441, 0
      %v457 = vsel %vm452, %v442, 0
      %459 = vmatprep.subr.bf16.mxu0 %v457
      %460 = vmatpush1.bf16.msra.mxu0 %v454
      %461 = vmatprep.subr.bf16.mxu0 0
      %462 = vmatpush1.bf16.msra.mxu0 0
      %463 = vmatprep.subr.bf16.mxu0 0
      %464 = vmatpush1.bf16.msra.mxu0 0
      %465 = vmatprep.subr.bf16.mxu0 0
      %466 = vmatpush1.bf16.msra.mxu0 0
      %467 = vmatprep.subr.bf16.mxu0 0
      %468 = vmatpush1.bf16.msra.mxu0 0
      %469 = vmatprep.subr.bf16.mxu0 0
      %470 = vmatpush1.bf16.msra.mxu0 0
      %471 = vmatprep.subr.bf16.mxu0 0
      %472 = vmatpush1.bf16.msra.mxu0 0
      %473 = vmatprep.subr.bf16.mxu0 0
      %474 = vmatpush1.bf16.msra.mxu0 0
      %475 = vmatprep.subr.bf16.mxu0 0
      %476 = vmatpush1.bf16.msra.mxu0 0
      %477 = vmatprep.subr.bf16.mxu0 0
      %478 = vmatpush1.bf16.msra.mxu0 0
      %479 = vmatprep.subr.bf16.mxu0 0
      %480 = vmatpush1.bf16.msra.mxu0 0
      %481 = vmatprep.subr.bf16.mxu0 0
      %482 = vmatpush1.bf16.msra.mxu0 0
      %483 = vmatprep.subr.bf16.mxu0 0
      %484 = vmatpush1.bf16.msra.mxu0 0
      %485 = vmatprep.subr.bf16.mxu0 0
      %486 = vmatpush1.bf16.msra.mxu0 0
      %487 = vmatprep.subr.bf16.mxu0 0
      %488 = vmatpush1.bf16.msra.mxu0 0
      %489 = vmatprep.subr.bf16.mxu0 0
      %490 = vmatpush1.bf16.msra.mxu0 0
      %491 = vmatprep.mubr.bf16.mxu0 0
      %492 = vmatmul.mubr.bf16.gmra.mrb[0].mxu0 %v450
      %v493 = vpop.f32.mrb[0].mxu0
      %v494 = vadd.f32 %v446, %v493
      %v495 = vpop.f32.mrb[0].mxu0
      %v496 = vadd.f32 %v446, %v495
      %v497 = vpop.f32.mrb[0].mxu0
      %v498 = vpop.f32.mrb[0].mxu0
      %499 = vdwg.mxu0
      %v500 = vmax.f32 %v494, 0.0
      %v501 = vmax.f32 %v496, 0.0
      %v502 = vpack.c.bf16 %v500, %v500
      %v503 = vpack.c.bf16 %v501, %v501
      %505 = vset.pattern.permute.xlu0 0
      %506 = vperm.xlu0 %505, %v360
      %v507 = vpop.permute.xlu0 %506
      %v510 = vsel %vm448, %v359, 0
      %v513 = vsel %vm452, %v502, 0
      %v516 = vsel %vm452, %v503, 0
      %518 = vmatprep.subr.bf16.mxu0 %v516
      %519 = vmatpush1.bf16.msra.mxu0 %v513
      %520 = vmatprep.subr.bf16.mxu0 0
      %521 = vmatpush1.bf16.msra.mxu0 0
      %522 = vmatprep.subr.bf16.mxu0 0
      %523 = vmatpush1.bf16.msra.mxu0 0
      %524 = vmatprep.subr.bf16.mxu0 0
      %525 = vmatpush1.bf16.msra.mxu0 0
      %526 = vmatprep.subr.bf16.mxu0 0
      %527 = vmatpush1.bf16.msra.mxu0 0
      %528 = vmatprep.subr.bf16.mxu0 0
      %529 = vmatpush1.bf16.msra.mxu0 0
      %530 = vmatprep.subr.bf16.mxu0 0
      %531 = vmatpush1.bf16.msra.mxu0 0
      %532 = vmatprep.subr.bf16.mxu0 0
      %533 = vmatpush1.bf16.msra.mxu0 0
      %534 = vmatprep.subr.bf16.mxu0 0
      %535 = vmatpush1.bf16.msra.mxu0 0
      %536 = vmatprep.subr.bf16.mxu0 0
      %537 = vmatpush1.bf16.msra.mxu0 0
      %538 = vmatprep.subr.bf16.mxu0 0
      %539 = vmatpush1.bf16.msra.mxu0 0
      %540 = vmatprep.subr.bf16.mxu0 0
      %541 = vmatpush1.bf16.msra.mxu0 0
      %542 = vmatprep.subr.bf16.mxu0 0
      %543 = vmatpush1.bf16.msra.mxu0 0
      %544 = vmatprep.subr.bf16.mxu0 0
      %545 = vmatpush1.bf16.msra.mxu0 0
      %546 = vmatprep.subr.bf16.mxu0 0
      %547 = vmatpush1.bf16.msra.mxu0 0
      %548 = vmatprep.subr.bf16.mxu0 0
      %549 = vmatpush1.bf16.msra.mxu0 0
      %550 = vmatprep.mubr.bf16.mxu0 0
      %551 = vmatmul.mubr.bf16.gmra.mrb[0].mxu0 %v510
      %v552 = vpop.f32.mrb[0].mxu0
      %v553 = vadd.f32 %v507, %v552
      %v554 = vpop.f32.mrb[0].mxu0
      %v555 = vadd.f32 %v507, %v554
      %v556 = vpop.f32.mrb[0].mxu0
      %v557 = vpop.f32.mrb[0].mxu0
      %558 = vdwg.mxu0
      %v559 = vadd.f32 %v431, %v553
      %v560 = vadd.f32 %v433, %v555
      %v561 = vmax.f32 %v559, 0.0
      %v562 = vmax.f32 %v560, 0.0
      %v563 = vpack.c.bf16 %v561, %v561
      %v564 = vpack.c.bf16 %v562, %v562
      %v565 = vld [vmem:[%s339] sm:$0xff]
      %v566 = vld [vmem:[%s339 + $0x8] sm:$0xff]
      %v567 = vld [vmem:[%s339 + $0x10] sm:$0xff]
      %v568 = vld [vmem:[%s339 + $0x18] sm:$0xff]
      %v569 = vld [vmem:[%s339 + $0x20] sm:$0xff]
      %v570 = vld [vmem:[%s339 + $0x28] sm:$0xff]
      %v571 = vld [vmem:[%s339 + $0x30] sm:$0xff]
      %v572 = vld [vmem:[%s339 + $0x38] sm:$0xff]
      %v573 = vld [vmem:[%s339 + $0x40] sm:$0xff]
      %v574 = vld [vmem:[%s339 + $0x48] sm:$0xff]
      %v575 = vld [vmem:[%s339 + $0x50] sm:$0xff]
      %v576 = vld [vmem:[%s339 + $0x58] sm:$0xff]
      %v577 = vld [vmem:[%s339 + $0x60] sm:$0xff]
      %v578 = vld [vmem:[%s339 + $0x68] sm:$0xff]
      %v579 = vld [vmem:[%s339 + $0x70] sm:$0xff]
      %v580 = vld [vmem:[%s339 + $0x78] sm:$0xff]
      %v581 = vld [vmem:[%s339 + $0x80] sm:$0xff]
      %v582 = vld [vmem:[%s339 + $0x88] sm:$0xff]
      %v583 = vld [vmem:[%s339 + $0x90] sm:$0xff]
      %v584 = vld [vmem:[%s339 + $0x98] sm:$0xff]
      %v585 = vld [vmem:[%s339 + $0xa0] sm:$0xff]
      %v586 = vld [vmem:[%s339 + $0xa8] sm:$0xff]
      %v587 = vld [vmem:[%s339 + $0xb0] sm:$0xff]
      %v588 = vld [vmem:[%s339 + $0xb8] sm:$0xff]
      %v589 = vld [vmem:[%s339 + $0xc0] sm:$0xff]
      %v590 = vld [vmem:[%s339 + $0xc8] sm:$0xff]
      %v591 = vld [vmem:[%s339 + $0xd0] sm:$0xff]
      %v592 = vld [vmem:[%s339 + $0xd8] sm:$0xff]
      %v593 = vld [vmem:[%s339 + $0xe0] sm:$0xff]
      %v594 = vld [vmem:[%s339 + $0xe8] sm:$0xff]
      %v595 = vld [vmem:[%s339 + $0xf0] sm:$0xff]
      %v596 = vld [vmem:[%s339 + $0xf8] sm:$0xff]
      %v597 = vld [vmem:[%s339 + $0x100] sm:$0xff]
      %v598 = vld [vmem:[%s339 + $0x108] sm:$0xff]
      %v599 = vld [vmem:[%s339 + $0x110] sm:$0xff]
      %v600 = vld [vmem:[%s339 + $0x118] sm:$0xff]
      %v601 = vld [vmem:[%s339 + $0x120] sm:$0xff]
      %v602 = vld [vmem:[%s339 + $0x128] sm:$0xff]
      %v603 = vld [vmem:[%s339 + $0x130] sm:$0xff]
      %v604 = vld [vmem:[%s339 + $0x138] sm:$0xff]
      %v605 = vld [vmem:[%s339 + $0x140] sm:$0xff]
      %v606 = vld [vmem:[%s339 + $0x148] sm:$0xff]
      %v607 = vld [vmem:[%s339 + $0x150] sm:$0xff]
      %v608 = vld [vmem:[%s339 + $0x158] sm:$0xff]
      %v609 = vld [vmem:[%s339 + $0x160] sm:$0xff]
      %v610 = vld [vmem:[%s339 + $0x168] sm:$0xff]
      %v611 = vld [vmem:[%s339 + $0x170] sm:$0xff]
      %v612 = vld [vmem:[%s339 + $0x178] sm:$0xff]
      %v613 = vld [vmem:[%s339 + $0x180] sm:$0xff]
      %v614 = vld [vmem:[%s339 + $0x188] sm:$0xff]
      %v615 = vld [vmem:[%s339 + $0x190] sm:$0xff]
      %v616 = vld [vmem:[%s339 + $0x198] sm:$0xff]
      %v617 = vld [vmem:[%s339 + $0x1a0] sm:$0xff]
      %v618 = vld [vmem:[%s339 + $0x1a8] sm:$0xff]
      %v619 = vld [vmem:[%s339 + $0x1b0] sm:$0xff]
      %v620 = vld [vmem:[%s339 + $0x1b8] sm:$0xff]
      %v621 = vld [vmem:[%s339 + $0x1c0] sm:$0xff]
      %v622 = vld [vmem:[%s339 + $0x1c8] sm:$0xff]
      %v623 = vld [vmem:[%s339 + $0x1d0] sm:$0xff]
      %v624 = vld [vmem:[%s339 + $0x1d8] sm:$0xff]
      %v625 = vld [vmem:[%s339 + $0x1e0] sm:$0xff]
      %v626 = vld [vmem:[%s339 + $0x1e8] sm:$0xff]
      %v627 = vld [vmem:[%s339 + $0x1f0] sm:$0xff]
      %v628 = vld [vmem:[%s339 + $0x1f8] sm:$0xff]
      %v629 = vld [vmem:[%s339 + $0x200] sm:$0xff]
      %v630 = vld [vmem:[%s339 + $0x208] sm:$0xff]
      %v631 = vld [vmem:[%s339 + $0x210] sm:$0xff]
      %v632 = vld [vmem:[%s339 + $0x218] sm:$0xff]
      %v633 = vld [vmem:[%s339 + $0x220] sm:$0xff]
      %v634 = vld [vmem:[%s339 + $0x228] sm:$0xff]
      %v635 = vld [vmem:[%s339 + $0x230] sm:$0xff]
      %v636 = vld [vmem:[%s339 + $0x238] sm:$0xff]
      %v637 = vld [vmem:[%s339 + $0x240] sm:$0xff]
      %v638 = vld [vmem:[%s339 + $0x248] sm:$0xff]
      %v639 = vld [vmem:[%s339 + $0x250] sm:$0xff]
      %v640 = vld [vmem:[%s339 + $0x258] sm:$0xff]
      %v641 = vld [vmem:[%s339 + $0x260] sm:$0xff]
      %v642 = vld [vmem:[%s339 + $0x268] sm:$0xff]
      %v643 = vld [vmem:[%s339 + $0x270] sm:$0xff]
      %v644 = vld [vmem:[%s339 + $0x278] sm:$0xff]
      %v645 = vld [vmem:[%s339 + $0x280] sm:$0xff]
      %v646 = vld [vmem:[%s339 + $0x288] sm:$0xff]
      %v647 = vld [vmem:[%s339 + $0x290] sm:$0xff]
      %v648 = vld [vmem:[%s339 + $0x298] sm:$0xff]
      %v649 = vld [vmem:[%s339 + $0x2a0] sm:$0xff]
      %v650 = vld [vmem:[%s339 + $0x2a8] sm:$0xff]
      %v651 = vld [vmem:[%s339 + $0x2b0] sm:$0xff]
      %v652 = vld [vmem:[%s339 + $0x2b8] sm:$0xff]
      %v653 = vld [vmem:[%s339 + $0x2c0] sm:$0xff]
      %v654 = vld [vmem:[%s339 + $0x2c8] sm:$0xff]
      %v655 = vld [vmem:[%s339 + $0x2d0] sm:$0xff]
      %v656 = vld [vmem:[%s339 + $0x2d8] sm:$0xff]
      %v657 = vld [vmem:[%s339 + $0x2e0] sm:$0xff]
      %v658 = vld [vmem:[%s339 + $0x2e8] sm:$0xff]
      %v659 = vld [vmem:[%s339 + $0x2f0] sm:$0xff]
      %v660 = vld [vmem:[%s339 + $0x2f8] sm:$0xff]
      %v661 = vld [vmem:[%s339 + $0x300] sm:$0xff]
      %v662 = vld [vmem:[%s339 + $0x308] sm:$0xff]
      %v663 = vld [vmem:[%s339 + $0x310] sm:$0xff]
      %v664 = vld [vmem:[%s339 + $0x318] sm:$0xff]
      %v665 = vld [vmem:[%s339 + $0x320] sm:$0xff]
      %v666 = vld [vmem:[%s339 + $0x328] sm:$0xff]
      %v667 = vld [vmem:[%s339 + $0x330] sm:$0xff]
      %v668 = vld [vmem:[%s339 + $0x338] sm:$0xff]
      %v669 = vld [vmem:[%s339 + $0x340] sm:$0xff]
      %v670 = vld [vmem:[%s339 + $0x348] sm:$0xff]
      %v671 = vld [vmem:[%s339 + $0x350] sm:$0xff]
      %v672 = vld [vmem:[%s339 + $0x358] sm:$0xff]
      %v673 = vld [vmem:[%s339 + $0x360] sm:$0xff]
      %v674 = vld [vmem:[%s339 + $0x368] sm:$0xff]
      %v675 = vld [vmem:[%s339 + $0x370] sm:$0xff]
      %v676 = vld [vmem:[%s339 + $0x378] sm:$0xff]
      %v677 = vld [vmem:[%s339 + $0x380] sm:$0xff]
      %v678 = vld [vmem:[%s339 + $0x388] sm:$0xff]
      %v679 = vld [vmem:[%s339 + $0x390] sm:$0xff]
      %v680 = vld [vmem:[%s339 + $0x398] sm:$0xff]
      %v681 = vld [vmem:[%s339 + $0x3a0] sm:$0xff]
      %v682 = vld [vmem:[%s339 + $0x3a8] sm:$0xff]
      %v683 = vld [vmem:[%s339 + $0x3b0] sm:$0xff]
      %v684 = vld [vmem:[%s339 + $0x3b8] sm:$0xff]
      %v685 = vld [vmem:[%s339 + $0x3c0] sm:$0xff]
      %v686 = vld [vmem:[%s339 + $0x3c8] sm:$0xff]
      %v687 = vld [vmem:[%s339 + $0x3d0] sm:$0xff]
      %v688 = vld [vmem:[%s339 + $0x3d8] sm:$0xff]
      %v689 = vld [vmem:[%s339 + $0x3e0] sm:$0xff]
      %v690 = vld [vmem:[%s339 + $0x3e8] sm:$0xff]
      %v691 = vld [vmem:[%s339 + $0x3f0] sm:$0xff]
      %v692 = vld [vmem:[%s339 + $0x3f8] sm:$0xff]
      %v821 = vunpack.c.l.b16 %v565
      %v822 = vunpack.c.h.b16 %v565
      %v823 = vunpack.c.l.b16 %v566
      %v824 = vunpack.c.h.b16 %v566
      %v825 = vunpack.c.l.b16 %v567
      %v826 = vunpack.c.h.b16 %v567
      %v827 = vunpack.c.l.b16 %v568
      %v828 = vunpack.c.h.b16 %v568
      %v829 = vunpack.c.l.b16 %v569
      %v830 = vunpack.c.h.b16 %v569
      %v831 = vunpack.c.l.b16 %v570
      %v832 = vunpack.c.h.b16 %v570
      %v833 = vunpack.c.l.b16 %v571
      %v834 = vunpack.c.h.b16 %v571
      %v835 = vunpack.c.l.b16 %v572
      %v836 = vunpack.c.h.b16 %v572
      %v837 = vunpack.c.l.b16 %v573
      %v838 = vunpack.c.h.b16 %v573
      %v839 = vunpack.c.l.b16 %v574
      %v840 = vunpack.c.h.b16 %v574
      %v841 = vunpack.c.l.b16 %v575
      %v842 = vunpack.c.h.b16 %v575
      %v843 = vunpack.c.l.b16 %v576
      %v844 = vunpack.c.h.b16 %v576
      %v845 = vunpack.c.l.b16 %v577
      %v846 = vunpack.c.h.b16 %v577
      %v847 = vunpack.c.l.b16 %v578
      %v848 = vunpack.c.h.b16 %v578
      %v849 = vunpack.c.l.b16 %v579
      %v850 = vunpack.c.h.b16 %v579
      %v851 = vunpack.c.l.b16 %v580
      %v852 = vunpack.c.h.b16 %v580
      %v853 = vunpack.c.l.b16 %v581
      %v854 = vunpack.c.h.b16 %v581
      %v855 = vunpack.c.l.b16 %v582
      %v856 = vunpack.c.h.b16 %v582
      %v857 = vunpack.c.l.b16 %v583
      %v858 = vunpack.c.h.b16 %v583
      %v859 = vunpack.c.l.b16 %v584
      %v860 = vunpack.c.h.b16 %v584
      %v861 = vunpack.c.l.b16 %v585
      %v862 = vunpack.c.h.b16 %v585
      %v863 = vunpack.c.l.b16 %v586
      %v864 = vunpack.c.h.b16 %v586
      %v865 = vunpack.c.l.b16 %v587
      %v866 = vunpack.c.h.b16 %v587
      %v867 = vunpack.c.l.b16 %v588
      %v868 = vunpack.c.h.b16 %v588
      %v869 = vunpack.c.l.b16 %v589
      %v870 = vunpack.c.h.b16 %v589
      %v871 = vunpack.c.l.b16 %v590
      %v872 = vunpack.c.h.b16 %v590
      %v873 = vunpack.c.l.b16 %v591
      %v874 = vunpack.c.h.b16 %v591
      %v875 = vunpack.c.l.b16 %v592
      %v876 = vunpack.c.h.b16 %v592
      %v877 = vunpack.c.l.b16 %v593
      %v878 = vunpack.c.h.b16 %v593
      %v879 = vunpack.c.l.b16 %v594
      %v880 = vunpack.c.h.b16 %v594
      %v881 = vunpack.c.l.b16 %v595
      %v882 = vunpack.c.h.b16 %v595
      %v883 = vunpack.c.l.b16 %v596
      %v884 = vunpack.c.h.b16 %v596
      %v885 = vunpack.c.l.b16 %v597
      %v886 = vunpack.c.h.b16 %v597
      %v887 = vunpack.c.l.b16 %v598
      %v888 = vunpack.c.h.b16 %v598
      %v889 = vunpack.c.l.b16 %v599
      %v890 = vunpack.c.h.b16 %v599
      %v891 = vunpack.c.l.b16 %v600
      %v892 = vunpack.c.h.b16 %v600
      %v893 = vunpack.c.l.b16 %v601
      %v894 = vunpack.c.h.b16 %v601
      %v895 = vunpack.c.l.b16 %v602
      %v896 = vunpack.c.h.b16 %v602
      %v897 = vunpack.c.l.b16 %v603
      %v898 = vunpack.c.h.b16 %v603
      %v899 = vunpack.c.l.b16 %v604
      %v900 = vunpack.c.h.b16 %v604
      %v901 = vunpack.c.l.b16 %v605
      %v902 = vunpack.c.h.b16 %v605
      %v903 = vunpack.c.l.b16 %v606
      %v904 = vunpack.c.h.b16 %v606
      %v905 = vunpack.c.l.b16 %v607
      %v906 = vunpack.c.h.b16 %v607
      %v907 = vunpack.c.l.b16 %v608
      %v908 = vunpack.c.h.b16 %v608
      %v909 = vunpack.c.l.b16 %v609
      %v910 = vunpack.c.h.b16 %v609
      %v911 = vunpack.c.l.b16 %v610
      %v912 = vunpack.c.h.b16 %v610
      %v913 = vunpack.c.l.b16 %v611
      %v914 = vunpack.c.h.b16 %v611
      %v915 = vunpack.c.l.b16 %v612
      %v916 = vunpack.c.h.b16 %v612
      %v917 = vunpack.c.l.b16 %v613
      %v918 = vunpack.c.h.b16 %v613
      %v919 = vunpack.c.l.b16 %v614
      %v920 = vunpack.c.h.b16 %v614
      %v921 = vunpack.c.l.b16 %v615
      %v922 = vunpack.c.h.b16 %v615
      %v923 = vunpack.c.l.b16 %v616
      %v924 = vunpack.c.h.b16 %v616
      %v925 = vunpack.c.l.b16 %v617
      %v926 = vunpack.c.h.b16 %v617
      %v927 = vunpack.c.l.b16 %v618
      %v928 = vunpack.c.h.b16 %v618
      %v929 = vunpack.c.l.b16 %v619
      %v930 = vunpack.c.h.b16 %v619
      %v931 = vunpack.c.l.b16 %v620
      %v932 = vunpack.c.h.b16 %v620
      %v933 = vunpack.c.l.b16 %v621
      %v934 = vunpack.c.h.b16 %v621
      %v935 = vunpack.c.l.b16 %v622
      %v936 = vunpack.c.h.b16 %v622
      %v937 = vunpack.c.l.b16 %v623
      %v938 = vunpack.c.h.b16 %v623
      %v939 = vunpack.c.l.b16 %v624
      %v940 = vunpack.c.h.b16 %v624
      %v941 = vunpack.c.l.b16 %v625
      %v942 = vunpack.c.h.b16 %v625
      %v943 = vunpack.c.l.b16 %v626
      %v944 = vunpack.c.h.b16 %v626
      %v945 = vunpack.c.l.b16 %v627
      %v946 = vunpack.c.h.b16 %v627
      %v947 = vunpack.c.l.b16 %v628
      %v948 = vunpack.c.h.b16 %v628
      %v949 = vunpack.c.l.b16 %v629
      %v950 = vunpack.c.h.b16 %v629
      %v951 = vunpack.c.l.b16 %v630
      %v952 = vunpack.c.h.b16 %v630
      %v953 = vunpack.c.l.b16 %v631
      %v954 = vunpack.c.h.b16 %v631
      %v955 = vunpack.c.l.b16 %v632
      %v956 = vunpack.c.h.b16 %v632
      %v957 = vunpack.c.l.b16 %v633
      %v958 = vunpack.c.h.b16 %v633
      %v959 = vunpack.c.l.b16 %v634
      %v960 = vunpack.c.h.b16 %v634
      %v961 = vunpack.c.l.b16 %v635
      %v962 = vunpack.c.h.b16 %v635
      %v963 = vunpack.c.l.b16 %v636
      %v964 = vunpack.c.h.b16 %v636
      %v965 = vunpack.c.l.b16 %v637
      %v966 = vunpack.c.h.b16 %v637
      %v967 = vunpack.c.l.b16 %v638
      %v968 = vunpack.c.h.b16 %v638
      %v969 = vunpack.c.l.b16 %v639
      %v970 = vunpack.c.h.b16 %v639
      %v971 = vunpack.c.l.b16 %v640
      %v972 = vunpack.c.h.b16 %v640
      %v973 = vunpack.c.l.b16 %v641
      %v974 = vunpack.c.h.b16 %v641
      %v975 = vunpack.c.l.b16 %v642
      %v976 = vunpack.c.h.b16 %v642
      %v977 = vunpack.c.l.b16 %v643
      %v978 = vunpack.c.h.b16 %v643
      %v979 = vunpack.c.l.b16 %v644
      %v980 = vunpack.c.h.b16 %v644
      %v981 = vunpack.c.l.b16 %v645
      %v982 = vunpack.c.h.b16 %v645
      %v983 = vunpack.c.l.b16 %v646
      %v984 = vunpack.c.h.b16 %v646
      %v985 = vunpack.c.l.b16 %v647
      %v986 = vunpack.c.h.b16 %v647
      %v987 = vunpack.c.l.b16 %v648
      %v988 = vunpack.c.h.b16 %v648
      %v989 = vunpack.c.l.b16 %v649
      %v990 = vunpack.c.h.b16 %v649
      %v991 = vunpack.c.l.b16 %v650
      %v992 = vunpack.c.h.b16 %v650
      %v993 = vunpack.c.l.b16 %v651
      %v994 = vunpack.c.h.b16 %v651
      %v995 = vunpack.c.l.b16 %v652
      %v996 = vunpack.c.h.b16 %v652
      %v997 = vunpack.c.l.b16 %v653
      %v998 = vunpack.c.h.b16 %v653
      %v999 = vunpack.c.l.b16 %v654
      %v1000 = vunpack.c.h.b16 %v654
      %v1001 = vunpack.c.l.b16 %v655
      %v1002 = vunpack.c.h.b16 %v655
      %v1003 = vunpack.c.l.b16 %v656
      %v1004 = vunpack.c.h.b16 %v656
      %v1005 = vunpack.c.l.b16 %v657
      %v1006 = vunpack.c.h.b16 %v657
      %v1007 = vunpack.c.l.b16 %v658
      %v1008 = vunpack.c.h.b16 %v658
      %v1009 = vunpack.c.l.b16 %v659
      %v1010 = vunpack.c.h.b16 %v659
      %v1011 = vunpack.c.l.b16 %v660
      %v1012 = vunpack.c.h.b16 %v660
      %v1013 = vunpack.c.l.b16 %v661
      %v1014 = vunpack.c.h.b16 %v661
      %v1015 = vunpack.c.l.b16 %v662
      %v1016 = vunpack.c.h.b16 %v662
      %v1017 = vunpack.c.l.b16 %v663
      %v1018 = vunpack.c.h.b16 %v663
      %v1019 = vunpack.c.l.b16 %v664
      %v1020 = vunpack.c.h.b16 %v664
      %v1021 = vunpack.c.l.b16 %v665
      %v1022 = vunpack.c.h.b16 %v665
      %v1023 = vunpack.c.l.b16 %v666
      %v1024 = vunpack.c.h.b16 %v666
      %v1025 = vunpack.c.l.b16 %v667
      %v1026 = vunpack.c.h.b16 %v667
      %v1027 = vunpack.c.l.b16 %v668
      %v1028 = vunpack.c.h.b16 %v668
      %v1029 = vunpack.c.l.b16 %v669
      %v1030 = vunpack.c.h.b16 %v669
      %v1031 = vunpack.c.l.b16 %v670
      %v1032 = vunpack.c.h.b16 %v670
      %v1033 = vunpack.c.l.b16 %v671
      %v1034 = vunpack.c.h.b16 %v671
      %v1035 = vunpack.c.l.b16 %v672
      %v1036 = vunpack.c.h.b16 %v672
      %v1037 = vunpack.c.l.b16 %v673
      %v1038 = vunpack.c.h.b16 %v673
      %v1039 = vunpack.c.l.b16 %v674
      %v1040 = vunpack.c.h.b16 %v674
      %v1041 = vunpack.c.l.b16 %v675
      %v1042 = vunpack.c.h.b16 %v675
      %v1043 = vunpack.c.l.b16 %v676
      %v1044 = vunpack.c.h.b16 %v676
      %v1045 = vunpack.c.l.b16 %v677
      %v1046 = vunpack.c.h.b16 %v677
      %v1047 = vunpack.c.l.b16 %v678
      %v1048 = vunpack.c.h.b16 %v678
      %v1049 = vunpack.c.l.b16 %v679
      %v1050 = vunpack.c.h.b16 %v679
      %v1051 = vunpack.c.l.b16 %v680
      %v1052 = vunpack.c.h.b16 %v680
      %v1053 = vunpack.c.l.b16 %v681
      %v1054 = vunpack.c.h.b16 %v681
      %v1055 = vunpack.c.l.b16 %v682
      %v1056 = vunpack.c.h.b16 %v682
      %v1057 = vunpack.c.l.b16 %v683
      %v1058 = vunpack.c.h.b16 %v683
      %v1059 = vunpack.c.l.b16 %v684
      %v1060 = vunpack.c.h.b16 %v684
      %v1061 = vunpack.c.l.b16 %v685
      %v1062 = vunpack.c.h.b16 %v685
      %v1063 = vunpack.c.l.b16 %v686
      %v1064 = vunpack.c.h.b16 %v686
      %v1065 = vunpack.c.l.b16 %v687
      %v1066 = vunpack.c.h.b16 %v687
      %v1067 = vunpack.c.l.b16 %v688
      %v1068 = vunpack.c.h.b16 %v688
      %v1069 = vunpack.c.l.b16 %v689
      %v1070 = vunpack.c.h.b16 %v689
      %v1071 = vunpack.c.l.b16 %v690
      %v1072 = vunpack.c.h.b16 %v690
      %v1073 = vunpack.c.l.b16 %v691
      %v1074 = vunpack.c.h.b16 %v691
      %v1075 = vunpack.c.l.b16 %v692
      %v1076 = vunpack.c.h.b16 %v692
      %v1077 = vpack.c.b16 %v829, %v821
      %v1078 = vpack.c.b16 %v830, %v822
      %v1079 = vpack.c.b16 %v831, %v823
      %v1080 = vpack.c.b16 %v832, %v824
      %v1081 = vpack.c.b16 %v833, %v825
      %v1082 = vpack.c.b16 %v834, %v826
      %v1083 = vpack.c.b16 %v835, %v827
      %v1084 = vpack.c.b16 %v836, %v828
      %v1085 = vpack.c.b16 %v845, %v837
      %v1086 = vpack.c.b16 %v846, %v838
      %v1087 = vpack.c.b16 %v847, %v839
      %v1088 = vpack.c.b16 %v848, %v840
      %v1089 = vpack.c.b16 %v849, %v841
      %v1090 = vpack.c.b16 %v850, %v842
      %v1091 = vpack.c.b16 %v851, %v843
      %v1092 = vpack.c.b16 %v852, %v844
      %v1093 = vpack.c.b16 %v861, %v853
      %v1094 = vpack.c.b16 %v862, %v854
      %v1095 = vpack.c.b16 %v863, %v855
      %v1096 = vpack.c.b16 %v864, %v856
      %v1097 = vpack.c.b16 %v865, %v857
      %v1098 = vpack.c.b16 %v866, %v858
      %v1099 = vpack.c.b16 %v867, %v859
      %v1100 = vpack.c.b16 %v868, %v860
      %v1101 = vpack.c.b16 %v877, %v869
      %v1102 = vpack.c.b16 %v878, %v870
      %v1103 = vpack.c.b16 %v879, %v871
      %v1104 = vpack.c.b16 %v880, %v872
      %v1105 = vpack.c.b16 %v881, %v873
      %v1106 = vpack.c.b16 %v882, %v874
      %v1107 = vpack.c.b16 %v883, %v875
      %v1108 = vpack.c.b16 %v884, %v876
      %v1109 = vpack.c.b16 %v893, %v885
      %v1110 = vpack.c.b16 %v894, %v886
      %v1111 = vpack.c.b16 %v895, %v887
      %v1112 = vpack.c.b16 %v896, %v888
      %v1113 = vpack.c.b16 %v897, %v889
      %v1114 = vpack.c.b16 %v898, %v890
      %v1115 = vpack.c.b16 %v899, %v891
      %v1116 = vpack.c.b16 %v900, %v892
      %v1117 = vpack.c.b16 %v909, %v901
      %v1118 = vpack.c.b16 %v910, %v902
      %v1119 = vpack.c.b16 %v911, %v903
      %v1120 = vpack.c.b16 %v912, %v904
      %v1121 = vpack.c.b16 %v913, %v905
      %v1122 = vpack.c.b16 %v914, %v906
      %v1123 = vpack.c.b16 %v915, %v907
      %v1124 = vpack.c.b16 %v916, %v908
      %v1125 = vpack.c.b16 %v925, %v917
      %v1126 = vpack.c.b16 %v926, %v918
      %v1127 = vpack.c.b16 %v927, %v919
      %v1128 = vpack.c.b16 %v928, %v920
      %v1129 = vpack.c.b16 %v929, %v921
      %v1130 = vpack.c.b16 %v930, %v922
      %v1131 = vpack.c.b16 %v931, %v923
      %v1132 = vpack.c.b16 %v932, %v924
      %v1133 = vpack.c.b16 %v941, %v933
      %v1134 = vpack.c.b16 %v942, %v934
      %v1135 = vpack.c.b16 %v943, %v935
      %v1136 = vpack.c.b16 %v944, %v936
      %v1137 = vpack.c.b16 %v945, %v937
      %v1138 = vpack.c.b16 %v946, %v938
      %v1139 = vpack.c.b16 %v947, %v939
      %v1140 = vpack.c.b16 %v948, %v940
      %v1141 = vpack.c.b16 %v957, %v949
      %v1142 = vpack.c.b16 %v958, %v950
      %v1143 = vpack.c.b16 %v959, %v951
      %v1144 = vpack.c.b16 %v960, %v952
      %v1145 = vpack.c.b16 %v961, %v953
      %v1146 = vpack.c.b16 %v962, %v954
      %v1147 = vpack.c.b16 %v963, %v955
      %v1148 = vpack.c.b16 %v964, %v956
      %v1149 = vpack.c.b16 %v973, %v965
      %v1150 = vpack.c.b16 %v974, %v966
      %v1151 = vpack.c.b16 %v975, %v967
      %v1152 = vpack.c.b16 %v976, %v968
      %v1153 = vpack.c.b16 %v977, %v969
      %v1154 = vpack.c.b16 %v978, %v970
      %v1155 = vpack.c.b16 %v979, %v971
      %v1156 = vpack.c.b16 %v980, %v972
      %v1157 = vpack.c.b16 %v989, %v981
      %v1158 = vpack.c.b16 %v990, %v982
      %v1159 = vpack.c.b16 %v991, %v983
      %v1160 = vpack.c.b16 %v992, %v984
      %v1161 = vpack.c.b16 %v993, %v985
      %v1162 = vpack.c.b16 %v994, %v986
      %v1163 = vpack.c.b16 %v995, %v987
      %v1164 = vpack.c.b16 %v996, %v988
      %v1165 = vpack.c.b16 %v1005, %v997
      %v1166 = vpack.c.b16 %v1006, %v998
      %v1167 = vpack.c.b16 %v1007, %v999
      %v1168 = vpack.c.b16 %v1008, %v1000
      %v1169 = vpack.c.b16 %v1009, %v1001
      %v1170 = vpack.c.b16 %v1010, %v1002
      %v1171 = vpack.c.b16 %v1011, %v1003
      %v1172 = vpack.c.b16 %v1012, %v1004
      %v1173 = vpack.c.b16 %v1021, %v1013
      %v1174 = vpack.c.b16 %v1022, %v1014
      %v1175 = vpack.c.b16 %v1023, %v1015
      %v1176 = vpack.c.b16 %v1024, %v1016
      %v1177 = vpack.c.b16 %v1025, %v1017
      %v1178 = vpack.c.b16 %v1026, %v1018
      %v1179 = vpack.c.b16 %v1027, %v1019
      %v1180 = vpack.c.b16 %v1028, %v1020
      %v1181 = vpack.c.b16 %v1037, %v1029
      %v1182 = vpack.c.b16 %v1038, %v1030
      %v1183 = vpack.c.b16 %v1039, %v1031
      %v1184 = vpack.c.b16 %v1040, %v1032
      %v1185 = vpack.c.b16 %v1041, %v1033
      %v1186 = vpack.c.b16 %v1042, %v1034
      %v1187 = vpack.c.b16 %v1043, %v1035
      %v1188 = vpack.c.b16 %v1044, %v1036
      %v1189 = vpack.c.b16 %v1053, %v1045
      %v1190 = vpack.c.b16 %v1054, %v1046
      %v1191 = vpack.c.b16 %v1055, %v1047
      %v1192 = vpack.c.b16 %v1056, %v1048
      %v1193 = vpack.c.b16 %v1057, %v1049
      %v1194 = vpack.c.b16 %v1058, %v1050
      %v1195 = vpack.c.b16 %v1059, %v1051
      %v1196 = vpack.c.b16 %v1060, %v1052
      %v1197 = vpack.c.b16 %v1069, %v1061
      %v1198 = vpack.c.b16 %v1070, %v1062
      %v1199 = vpack.c.b16 %v1071, %v1063
      %v1200 = vpack.c.b16 %v1072, %v1064
      %v1201 = vpack.c.b16 %v1073, %v1065
      %v1202 = vpack.c.b16 %v1074, %v1066
      %v1203 = vpack.c.b16 %v1075, %v1067
      %v1204 = vpack.c.b16 %v1076, %v1068
      %1333 = vmatprep.subr.bf16.mxu0 %v1078
      %1334 = vmatpush1.bf16.msra.mxu0 %v1077
      %1335 = vmatprep.subr.bf16.mxu0 %v1086
      %1336 = vmatpush1.bf16.msra.mxu0 %v1085
      %1337 = vmatprep.subr.bf16.mxu0 %v1094
      %1338 = vmatpush1.bf16.msra.mxu0 %v1093
      %1339 = vmatprep.subr.bf16.mxu0 %v1102
      %1340 = vmatpush1.bf16.msra.mxu0 %v1101
      %1341 = vmatprep.subr.bf16.mxu0 %v1110
      %1342 = vmatpush1.bf16.msra.mxu0 %v1109
      %1343 = vmatprep.subr.bf16.mxu0 %v1118
      %1344 = vmatpush1.bf16.msra.mxu0 %v1117
      %1345 = vmatprep.subr.bf16.mxu0 %v1126
      %1346 = vmatpush1.bf16.msra.mxu0 %v1125
      %1347 = vmatprep.subr.bf16.mxu0 %v1134
      %1348 = vmatpush1.bf16.msra.mxu0 %v1133
      %1349 = vmatprep.subr.bf16.mxu0 %v1142
      %1350 = vmatpush1.bf16.msra.mxu0 %v1141
      %1351 = vmatprep.subr.bf16.mxu0 %v1150
      %1352 = vmatpush1.bf16.msra.mxu0 %v1149
      %1353 = vmatprep.subr.bf16.mxu0 %v1158
      %1354 = vmatpush1.bf16.msra.mxu0 %v1157
      %1355 = vmatprep.subr.bf16.mxu0 %v1166
      %1356 = vmatpush1.bf16.msra.mxu0 %v1165
      %1357 = vmatprep.subr.bf16.mxu0 %v1174
      %1358 = vmatpush1.bf16.msra.mxu0 %v1173
      %1359 = vmatprep.subr.bf16.mxu0 %v1182
      %1360 = vmatpush1.bf16.msra.mxu0 %v1181
      %1361 = vmatprep.subr.bf16.mxu0 %v1190
      %1362 = vmatpush1.bf16.msra.mxu0 %v1189
      %1363 = vmatprep.subr.bf16.mxu0 %v1198
      %1364 = vmatpush1.bf16.msra.mxu0 %v1197
      %1365 = vmatprep.mubr.bf16.mxu0 %v564
      %1366 = vmatmul.mubr.bf16.gmra.mrb[0].mxu0 %v563
      %v1367 = vpop.f32.mrb[0].mxu0
      %v1368 = vadd.f32 0.0, %v1367
      %v1369 = vpop.f32.mrb[0].mxu0
      %v1370 = vadd.f32 0.0, %v1369
      %v1371 = vpop.f32.mrb[0].mxu0
      %v1372 = vpop.f32.mrb[0].mxu0
      %1373 = vdwg.mxu0
      %1374 = vmatprep.subr.bf16.mxu0 %v1080
      %1375 = vmatpush1.bf16.msra.mxu0 %v1079
      %1376 = vmatprep.subr.bf16.mxu0 %v1088
      %1377 = vmatpush1.bf16.msra.mxu0 %v1087
      %1378 = vmatprep.subr.bf16.mxu0 %v1096
      %1379 = vmatpush1.bf16.msra.mxu0 %v1095
      %1380 = vmatprep.subr.bf16.mxu0 %v1104
      %1381 = vmatpush1.bf16.msra.mxu0 %v1103
      %1382 = vmatprep.subr.bf16.mxu0 %v1112
      %1383 = vmatpush1.bf16.msra.mxu0 %v1111
      %1384 = vmatprep.subr.bf16.mxu0 %v1120
      %1385 = vmatpush1.bf16.msra.mxu0 %v1119
      %1386 = vmatprep.subr.bf16.mxu0 %v1128
      %1387 = vmatpush1.bf16.msra.mxu0 %v1127
      %1388 = vmatprep.subr.bf16.mxu0 %v1136
      %1389 = vmatpush1.bf16.msra.mxu0 %v1135
      %1390 = vmatprep.subr.bf16.mxu0 %v1144
      %1391 = vmatpush1.bf16.msra.mxu0 %v1143
      %1392 = vmatprep.subr.bf16.mxu0 %v1152
      %1393 = vmatpush1.bf16.msra.mxu0 %v1151
      %1394 = vmatprep.subr.bf16.mxu0 %v1160
      %1395 = vmatpush1.bf16.msra.mxu0 %v1159
      %1396 = vmatprep.subr.bf16.mxu0 %v1168
      %1397 = vmatpush1.bf16.msra.mxu0 %v1167
      %1398 = vmatprep.subr.bf16.mxu0 %v1176
      %1399 = vmatpush1.bf16.msra.mxu0 %v1175
      %1400 = vmatprep.subr.bf16.mxu0 %v1184
      %1401 = vmatpush1.bf16.msra.mxu0 %v1183
      %1402 = vmatprep.subr.bf16.mxu0 %v1192
      %1403 = vmatpush1.bf16.msra.mxu0 %v1191
      %1404 = vmatprep.subr.bf16.mxu0 %v1200
      %1405 = vmatpush1.bf16.msra.mxu0 %v1199
      %1406 = vmatprep.mubr.bf16.mxu0 %v564
      %1407 = vmatmul.mubr.bf16.gmra.mrb[0].mxu0 %v563
      %v1408 = vpop.f32.mrb[0].mxu0
      %v1409 = vadd.f32 0.0, %v1408
      %v1410 = vpop.f32.mrb[0].mxu0
      %v1411 = vadd.f32 0.0, %v1410
      %v1412 = vpop.f32.mrb[0].mxu0
      %v1413 = vpop.f32.mrb[0].mxu0
      %1414 = vdwg.mxu0
      %1415 = vmatprep.subr.bf16.mxu0 %v1082
      %1416 = vmatpush1.bf16.msra.mxu0 %v1081
      %1417 = vmatprep.subr.bf16.mxu0 %v1090
      %1418 = vmatpush1.bf16.msra.mxu0 %v1089
      %1419 = vmatprep.subr.bf16.mxu0 %v1098
      %1420 = vmatpush1.bf16.msra.mxu0 %v1097
      %1421 = vmatprep.subr.bf16.mxu0 %v1106
      %1422 = vmatpush1.bf16.msra.mxu0 %v1105
      %1423 = vmatprep.subr.bf16.mxu0 %v1114
      %1424 = vmatpush1.bf16.msra.mxu0 %v1113
      %1425 = vmatprep.subr.bf16.mxu0 %v1122
      %1426 = vmatpush1.bf16.msra.mxu0 %v1121
      %1427 = vmatprep.subr.bf16.mxu0 %v1130
      %1428 = vmatpush1.bf16.msra.mxu0 %v1129
      %1429 = vmatprep.subr.bf16.mxu0 %v1138
      %1430 = vmatpush1.bf16.msra.mxu0 %v1137
      %1431 = vmatprep.subr.bf16.mxu0 %v1146
      %1432 = vmatpush1.bf16.msra.mxu0 %v1145
      %1433 = vmatprep.subr.bf16.mxu0 %v1154
      %1434 = vmatpush1.bf16.msra.mxu0 %v1153
      %1435 = vmatprep.subr.bf16.mxu0 %v1162
      %1436 = vmatpush1.bf16.msra.mxu0 %v1161
      %1437 = vmatprep.subr.bf16.mxu0 %v1170
      %1438 = vmatpush1.bf16.msra.mxu0 %v1169
      %1439 = vmatprep.subr.bf16.mxu0 %v1178
      %1440 = vmatpush1.bf16.msra.mxu0 %v1177
      %1441 = vmatprep.subr.bf16.mxu0 %v1186
      %1442 = vmatpush1.bf16.msra.mxu0 %v1185
      %1443 = vmatprep.subr.bf16.mxu0 %v1194
      %1444 = vmatpush1.bf16.msra.mxu0 %v1193
      %1445 = vmatprep.subr.bf16.mxu0 %v1202
      %1446 = vmatpush1.bf16.msra.mxu0 %v1201
      %1447 = vmatprep.mubr.bf16.mxu0 %v564
      %1448 = vmatmul.mubr.bf16.gmra.mrb[0].mxu0 %v563
      %v1449 = vpop.f32.mrb[0].mxu0
      %v1450 = vadd.f32 0.0, %v1449
      %v1451 = vpop.f32.mrb[0].mxu0
      %v1452 = vadd.f32 0.0, %v1451
      %v1453 = vpop.f32.mrb[0].mxu0
      %v1454 = vpop.f32.mrb[0].mxu0
      %1455 = vdwg.mxu0
      %1456 = vmatprep.subr.bf16.mxu0 %v1084
      %1457 = vmatpush1.bf16.msra.mxu0 %v1083
      %1458 = vmatprep.subr.bf16.mxu0 %v1092
      %1459 = vmatpush1.bf16.msra.mxu0 %v1091
      %1460 = vmatprep.subr.bf16.mxu0 %v1100
      %1461 = vmatpush1.bf16.msra.mxu0 %v1099
      %1462 = vmatprep.subr.bf16.mxu0 %v1108
      %1463 = vmatpush1.bf16.msra.mxu0 %v1107
      %1464 = vmatprep.subr.bf16.mxu0 %v1116
      %1465 = vmatpush1.bf16.msra.mxu0 %v1115
      %1466 = vmatprep.subr.bf16.mxu0 %v1124
      %1467 = vmatpush1.bf16.msra.mxu0 %v1123
      %1468 = vmatprep.subr.bf16.mxu0 %v1132
      %1469 = vmatpush1.bf16.msra.mxu0 %v1131
      %1470 = vmatprep.subr.bf16.mxu0 %v1140
      %1471 = vmatpush1.bf16.msra.mxu0 %v1139
      %1472 = vmatprep.subr.bf16.mxu0 %v1148
      %1473 = vmatpush1.bf16.msra.mxu0 %v1147
      %1474 = vmatprep.subr.bf16.mxu0 %v1156
      %1475 = vmatpush1.bf16.msra.mxu0 %v1155
      %1476 = vmatprep.subr.bf16.mxu0 %v1164
      %1477 = vmatpush1.bf16.msra.mxu0 %v1163
      %1478 = vmatprep.subr.bf16.mxu0 %v1172
      %1479 = vmatpush1.bf16.msra.mxu0 %v1171
      %1480 = vmatprep.subr.bf16.mxu0 %v1180
      %1481 = vmatpush1.bf16.msra.mxu0 %v1179
      %1482 = vmatprep.subr.bf16.mxu0 %v1188
      %1483 = vmatpush1.bf16.msra.mxu0 %v1187
      %1484 = vmatprep.subr.bf16.mxu0 %v1196
      %1485 = vmatpush1.bf16.msra.mxu0 %v1195
      %1486 = vmatprep.subr.bf16.mxu0 %v1204
      %1487 = vmatpush1.bf16.msra.mxu0 %v1203
      %1488 = vmatprep.mubr.bf16.mxu0 %v564
      %1489 = vmatmul.mubr.bf16.gmra.mrb[0].mxu0 %v563
      %v1490 = vpop.f32.mrb[0].mxu0
      %v1491 = vadd.f32 0.0, %v1490
      %v1492 = vpop.f32.mrb[0].mxu0
      %v1493 = vadd.f32 0.0, %v1492
      %v1494 = vpop.f32.mrb[0].mxu0
      %v1495 = vpop.f32.mrb[0].mxu0
      %1496 = vdwg.mxu0
      %1497 = vst [vmem:[%s349] sm:$0xff] %v1368
      %1498 = vst [vmem:[%s349 + $0x8] sm:$0xff] %v1370
      %1499 = vst [vmem:[%s349 + $0x10] sm:$0xff] %v1409
      %1500 = vst [vmem:[%s349 + $0x18] sm:$0xff] %v1411
      %1501 = vst [vmem:[%s349 + $0x20] sm:$0xff] %v1450
      %1502 = vst [vmem:[%s349 + $0x28] sm:$0xff] %v1452
      %1503 = vst [vmem:[%s349 + $0x30] sm:$0xff] %v1491
      %1504 = vst [vmem:[%s349 + $0x38] sm:$0xff] %v1493
      %s1505 = smul.u32 8, %s24
      %p1506 = scmp.lt.s32.totalorder %s23, 1
      %s1507 = scalar_select %p1506, %s23, 1
      %p1508 = scmp.lt.s32.totalorder %s1505, 7
      %s1509 = scalar_select %p1508, %s1505, 7
      %s1510 = smul.addr %s1507, 8
      %s1511 = sadd.s32 %s1509, %s1510
      %s1512 = smul.addr %s1511, 8
      %s1513 = scalar_lea.vmem %s8, %s1512
      // Predicated region
      $region53: #{sm_forward.1} parent=51 // pred_check
        %p1514 = pneg %p229
      $region54: #{sm_forward.1} parent=51 // pred_check_branch
        %1516 = sbr.rel (%p1514) target = $region56
      $region55: #{sm_forward.1} parent=51 // pred_region
        %s1517 = smul.u32 8, %s24
      $region56: #{sm_forward.1} parent=51 // pred_fallthru
        _
    $region52: #{sm_forward.1} parent=5 // pred_fallthru
      _
    %p1518 = scmp.le.s32.totalorder 2, %s14
    // Predicated region
    $region57: #{sm_forward.1} parent=5 // pred_check
      %p1519 = pneg %p1518
    $region58: #{sm_forward.1} parent=5 // pred_check_branch
      %1521 = sbr.rel (%p1519) target = $region60
    $region59: #{sm_forward.1} parent=5 // pred_region
      %s1522 = ssub.s32 %s14, 2
      // Predicated region
      $region61: #{sm_forward.1} parent=59 // pred_check
        %p1523 = pneg %p235
      $region62: #{sm_forward.1} parent=59 // pred_check_branch
        %1525 = sbr.rel (%p1523) target = $region64
      $region63: #{sm_forward.1} parent=59 // pred_region
        %s1526 = smul.u32 8, %s26
        %p1527 = scmp.lt.s32.totalorder %s25, 1
        %s1528 = scalar_select %p1527, %s25, 1
        %p1529 = scmp.lt.s32.totalorder %s1526, 7
        %s1530 = scalar_select %p1529, %s1526, 7
        %s1531 = smul.addr %s1528, 8
        %s1532 = sadd.s32 %s1530, %s1531
        %s1533 = smul.addr %s1532, 8
        %s1534 = scalar_lea.vmem %s8, %s1533
      $region64: #{sm_forward.1} parent=59 // pred_fallthru
        _
    $region60: #{sm_forward.1} parent=5 // pred_fallthru
      _
  $region6: #{sm_forward.1} parent=0 // loop_footer
    %s18 = sadd.s32 1, %s14
  $region7: #{sm_forward.1} parent=0 // loop_footer_branch
    %13 = sbr.rel target = $region3
  $region8: #{sm_forward.1} parent=0 // loop_exit
    _

</llo_original>
